<compile_context>
chip_gen: v7x
topology: tpu7x:2x2x1
jax: 0.10.0
libtpu: 0.0.40
codegen_flags: <defaults>
</compile_context>

<pallas_src>
import math
import functools

import jax
import jax.numpy as jnp
from jax.experimental import pallas as pl
from jax.experimental.pallas import tpu as pltpu


def _silu(x):
    # x * sigmoid(x), via tanh so no inf intermediates appear.
    return 0.5 * x * (1.0 + jnp.tanh(0.5 * x))


def _softplus(x):
    # matches F.softplus(beta=1, threshold=20)
    return jnp.where(x > 20.0, x, jnp.log1p(jnp.exp(jnp.minimum(x, 20.0))))


def mamba_block_kernel(x_ref, w_in_ref, w_conv_ref, b_conv_ref, w_xf_ref,
                       b_dt_ref, a_log_t_ref, d_ref, w_out_ref,
                       o_ref,
                       da_scr, dbu_scr, cb_scr, y_scr,
                       *, b_tile, seq_len, d_inner, d_state, d_conv, t_blk):
    f32 = jnp.float32
    bf16 = jnp.bfloat16
    rows = b_tile * seq_len          # batch-major flattened rows: r = b*l + t

    # ---- constant weights (single VMEM copy, loaded once per grid step) ----
    w_in = w_in_ref[...]                   # (d_model, 2*d_inner)      bf16
    w_xf = w_xf_ref[...]                   # (d_inner, d_inner + 2n)   bf16 (dt_proj folded in)
    w_out = w_out_ref[...]                 # (d_inner, d_model)        bf16
    wc = w_conv_ref[...]                   # (d_conv, d_inner)         f32
    bconv = b_conv_ref[...]                # (1, d_inner)              f32
    b_dt = b_dt_ref[...]                   # (1, d_inner)              f32
    A_t = -jnp.exp(a_log_t_ref[...])       # (d_state, d_inner)        f32
    Dvec = d_ref[...]                      # (1, d_inner)              f32

    # ---- in_proj: one flattened (b_tile*l, d_model) MXU matmul ----
    x_flat = x_ref[...]                                          # (rows, d_model)
    x_and_res = jnp.dot(x_flat.astype(bf16), w_in,
                        preferred_element_type=f32)              # (rows, 2*d_inner)
    x1 = x_and_res[:, :d_inner]
    res = x_and_res[:, d_inner:]

    # ---- depthwise causal conv1d: pltpu.roll (XLU) + hoisted per-tap masks ----
    # rows are batch-major, so masking (row % l) < shift after the roll keeps
    # every batch segment causally independent (no cross-batch leakage).
    row_ids = jax.lax.broadcasted_iota(jnp.int32, (rows, d_inner), 0)
    t_ids = row_ids % seq_len
    conv = jnp.broadcast_to(bconv, (rows, d_inner))
    for k in range(d_conv):
        shift = d_conv - 1 - k
        if shift == 0:
            xs = x1
        else:
            xs = jnp.where(t_ids < shift, 0.0, pltpu.roll(x1, shift, axis=0))
        conv = conv + xs * wc[k:k + 1, :]
    u = _silu(conv)                                              # (rows, d_inner)

    # ---- x_proj with dt_proj folded in: one (rows, d_inner+2n) matmul ----
    x_dbl = jnp.dot(u.astype(bf16), w_xf,
                    preferred_element_type=f32)                  # (rows, d_inner+2n)
    dt_lin = x_dbl[:, :d_inner]
    Bmat = x_dbl[:, d_inner:d_inner + d_state]                   # (rows, n)
    Cmat = x_dbl[:, d_inner + d_state:]                          # (rows, n)

    delta = _softplus(dt_lin + b_dt)                             # (rows, d_inner)
    # torch: delta @ ones(d_inner, d_inner) == per-timestep row-sum broadcast
    s = jnp.sum(delta, axis=-1, keepdims=True)                   # (rows, 1)
    su = s * u                                                   # (rows, d_inner)

    # ---- selective scan: time-blocked precompute + batched recurrence ----
    # For each block of t_blk steps, dA/dBu/C-broadcast are computed densely
    # (exp on the EUP, lane/sublane broadcasts) into VMEM scratch; the serial
    # fori_loop then only does FMA + sublane reduce for all b_tile batches.
    state = jnp.zeros((b_tile, d_state, d_inner), f32)
    n_blk = seq_len // t_blk
    for blk in range(n_blk):
        t0 = blk * t_blk
        for bi in range(b_tile):
            r0 = bi * seq_len + t0
            s_b = s[r0:r0 + t_blk]                               # (t_blk, 1)
            su_b = su[r0:r0 + t_blk]                             # (t_blk, d_inner)
            B_b = Bmat[r0:r0 + t_blk]                            # (t_blk, n)
            C_b = Cmat[r0:r0 + t_blk]                            # (t_blk, n)
            da_scr[:, bi, :, :] = jnp.exp(s_b[:, :, None] * A_t[None])
            dbu_scr[:, bi, :, :] = B_b[:, :, None] * su_b[:, None, :]
            cb_scr[:, bi, :, :] = jnp.broadcast_to(
                C_b[:, :, None], (t_blk, d_state, d_inner))

        def scan_step(t, st):
            st = da_scr[t] * st + dbu_scr[t]                     # (b_tile, n, d_inner)
            y_scr[t0 + t] = jnp.sum(cb_scr[t] * st, axis=1)      # (b_tile, d_inner)
            return st

        state = jax.lax.fori_loop(0, t_blk, scan_step, state,
                                  unroll=min(8, t_blk))

    # ---- back to batch-major rows, skip connection, gate, out_proj ----
    y = jnp.concatenate([y_scr[:, bi] for bi in range(b_tile)], axis=0)
    y = (y + u * Dvec) * _silu(res)
    o_ref[...] = jnp.dot(y.astype(bf16), w_out,
                         preferred_element_type=f32)             # (rows, d_model)


def mamba_block_forward(x, params, *, d_inner, d_state, dt_rank, d_conv,
                        b_tile=2, t_blk=None):
    b, l, d_model = x.shape
    assert b % b_tile == 0, "batch must be divisible by b_tile"
    if t_blk is None:
        t_blk = min(l, 64)       # cap the per-block dA/dBu slabs for long seqs
    assert l % t_blk == 0, "seq_len must be divisible by t_blk"

    # Fold dt_proj into x_proj:  dt_lin = u @ (w_x[:, :dt_rank] @ w_dt)
    w_x = params["w_x"]
    w_xf = jnp.concatenate(
        [w_x[:, :dt_rank] @ params["w_dt"], w_x[:, dt_rank:]], axis=1)

    # bf16 copies of the MXU weights (f32 accumulate in-kernel).
    w_in_bf = params["w_in"].astype(jnp.bfloat16)
    w_xf_bf = w_xf.astype(jnp.bfloat16)
    w_out_bf = params["w_out"].astype(jnp.bfloat16)

    kernel = functools.partial(
        mamba_block_kernel, b_tile=b_tile, seq_len=l, d_inner=d_inner,
        d_state=d_state, d_conv=d_conv, t_blk=t_blk)

    # Constant weights: whole-array VMEM residency, single copy (no per-grid-
    # step double buffering of never-changing blocks).
    vmem_full = pl.BlockSpec(memory_space=pltpu.MemorySpace.VMEM)

    rows_tile = b_tile * l
    in_specs = [
        pl.BlockSpec((rows_tile, d_model), lambda i: (i, 0)),   # x (flattened)
        vmem_full,   # w_in
        vmem_full,   # w_conv
        vmem_full,   # b_conv
        vmem_full,   # w_xf (x_proj with dt_proj folded in)
        vmem_full,   # b_dt
        vmem_full,   # a_log_t
        vmem_full,   # D
        vmem_full,   # w_out
    ]
    out_spec = pl.BlockSpec((rows_tile, d_model), lambda i: (i, 0))

    scratch_shapes = [
        pltpu.VMEM((t_blk, b_tile, d_state, d_inner), jnp.float32),  # dA block
        pltpu.VMEM((t_blk, b_tile, d_state, d_inner), jnp.float32),  # dB*u block
        pltpu.VMEM((t_blk, b_tile, d_state, d_inner), jnp.float32),  # C broadcast
        pltpu.VMEM((l, b_tile, d_inner), jnp.float32),               # y rows
    ]

    x2 = x.reshape(b * l, d_model)          # batch-major flatten (free in XLA)
    out = pl.pallas_call(
        kernel,
        out_shape=jax.ShapeDtypeStruct((b * l, d_model), jnp.float32),
        grid_spec=pltpu.PrefetchScalarGridSpec(
            num_scalar_prefetch=0,
            grid=(b // b_tile,),
            in_specs=in_specs,
            out_specs=out_spec,
            scratch_shapes=scratch_shapes,
        ),
        compiler_params=pltpu.CompilerParams(
            dimension_semantics=("parallel",),
            vmem_limit_bytes=32 * 1024 * 1024),
    )(x2, w_in_bf, params["w_conv"], params["b_conv"], w_xf_bf,
      params["b_dt"], params["a_log_t"], params["d"], w_out_bf)
    return out.reshape(b, l, d_model)


def mamba_block_reference(x, params, *, d_inner, d_state, dt_rank, d_conv):
    """Pure-JAX replica of the PyTorch forward, for verification."""
    b, l, d_model = x.shape
    x_and_res = x @ params["w_in"]
    xi, res = x_and_res[..., :d_inner], x_and_res[..., d_inner:]
    wc = params["w_conv"]                               # (d_conv, d_inner)
    conv = jnp.zeros_like(xi)
    for k in range(d_conv):
        shift = d_conv - 1 - k
        xs = jnp.pad(xi, ((0, 0), (shift, 0), (0, 0)))[:, :l, :]
        conv = conv + xs * wc[k]
    conv = conv + params["b_conv"][0]
    u = _silu(conv)
    x_dbl = u @ params["w_x"]
    delta_r = x_dbl[..., :dt_rank]
    B = x_dbl[..., dt_rank:dt_rank + d_state]
    C = x_dbl[..., dt_rank + d_state:]
    delta = _softplus(delta_r @ params["w_dt"] + params["b_dt"][0])
    # torch: delta @ ones(d_inner, d_inner) -> per-timestep row-sum broadcast
    s = jnp.sum(delta, axis=-1, keepdims=True)          # (b, l, 1)
    A = -jnp.exp(params["a_log_t"].T)                   # (d_inner, n)
    deltaA = jnp.exp(s[..., None] * A[None, None])               # (b,l,d,n)
    deltaB_u = s[..., None] * u[..., None] * B[:, :, None, :]    # (b,l,d,n)

    def step(state, inp):
        dA, dBu, Ci = inp
        state = dA * state + dBu
        y = jnp.einsum("bdn,bn->bd", state, Ci)
        return state, y

    state0 = jnp.zeros((b, d_inner, d_state), jnp.float32)
    _, ys = jax.lax.scan(
        step, state0,
        (jnp.moveaxis(deltaA, 1, 0), jnp.moveaxis(deltaB_u, 1, 0),
         jnp.moveaxis(C, 1, 0)))
    y = jnp.moveaxis(ys, 0, 1)                          # (b, l, d_inner)
    y = y + u * params["d"][0]
    y = y * _silu(res)
    return y @ params["w_out"]


if __name__ == "__main__":
    # ModelArgs: d_model=32 -> d_inner=64, dt_rank=ceil(32/16)=2, d_state=16, d_conv=4
    d_model = 32
    d_state = 16
    expand = 2
    d_conv = 4
    d_inner = expand * d_model
    dt_rank = math.ceil(d_model / 16)
    batch, seq_len = 4, 8

    key = jax.random.PRNGKey(0)
    keys = jax.random.split(key, 8)
    scale = 0.1
    params = {
        # in_proj: Linear(d_model, 2*d_inner, bias=False)
        "w_in": jax.random.normal(keys[0], (d_model, 2 * d_inner), jnp.float32) * scale,
        # conv1d: depthwise, weight (d_inner,1,d_conv) -> stored as (d_conv, d_inner)
        "w_conv": jax.random.normal(keys[1], (d_conv, d_inner), jnp.float32) * scale,
        "b_conv": jax.random.normal(keys[2], (1, d_inner), jnp.float32) * scale,
        # x_proj: Linear(d_inner, dt_rank + 2*d_state, bias=False)
        "w_x": jax.random.normal(keys[3], (d_inner, dt_rank + 2 * d_state), jnp.float32) * scale,
        # dt_proj: Linear(dt_rank, d_inner, bias=True); bias shifted so delta is small
        # (keeps exp(s*A) in a numerically interesting range for the scan test)
        "w_dt": jax.random.normal(keys[4], (dt_rank, d_inner), jnp.float32) * scale,
        "b_dt": jax.random.normal(keys[5], (1, d_inner), jnp.float32) * scale - 4.0,
        # A_log = log(repeat(arange(1, d_state+1), 'n -> d n')), stored transposed (n, d_inner)
        "a_log_t": jnp.log(jnp.tile(
            jnp.arange(1, d_state + 1, dtype=jnp.float32)[:, None], (1, d_inner))),
        "d": jnp.ones((1, d_inner), jnp.float32),
        # out_proj: Linear(d_inner, d_model, bias=False)
        "w_out": jax.random.normal(keys[6], (d_inner, d_model), jnp.float32) * scale,
    }
    x = jax.random.normal(keys[7], (batch, seq_len, d_model), jnp.float32)

    out = mamba_block_forward(x, params, d_inner=d_inner, d_state=d_state,
                              dt_rank=dt_rank, d_conv=d_conv, b_tile=2)
    out = jax.block_until_ready(out)

    ref = mamba_block_reference(x, params, d_inner=d_inner, d_state=d_state,
                                dt_rank=dt_rank, d_conv=d_conv)
    assert out.shape == (batch, seq_len, d_model)
    max_err = float(jnp.max(jnp.abs(out - ref)))
    # bf16 MXU matmuls (in_proj / fused x_proj / out_proj) vs f32 reference.
    if not jnp.allclose(out, ref, atol=5e-3, rtol=5e-2):
        raise AssertionError(f"Pallas kernel mismatch vs reference (max abs err {max_err})")
    print("KERNEL_OK")
</pallas_src>

<mosaic_0001>
module attributes {stable_mosaic.version = 11 : i64} {
  func.func @mamba_block_kernel(%arg0: i32, %arg1: memref<16x32xf32, #tpu.memory_space<vmem>>, %arg2: memref<32x128xbf16, #tpu.memory_space<vmem>>, %arg3: memref<4x64xf32, #tpu.memory_space<vmem>>, %arg4: memref<1x64xf32, #tpu.memory_space<vmem>>, %arg5: memref<64x96xbf16, #tpu.memory_space<vmem>>, %arg6: memref<1x64xf32, #tpu.memory_space<vmem>>, %arg7: memref<16x64xf32, #tpu.memory_space<vmem>>, %arg8: memref<1x64xf32, #tpu.memory_space<vmem>>, %arg9: memref<64x32xbf16, #tpu.memory_space<vmem>>, %arg10: memref<16x32xf32, #tpu.memory_space<vmem>>, %arg11: memref<8x2x16x64xf32, #tpu.memory_space<vmem>>, %arg12: memref<8x2x16x64xf32, #tpu.memory_space<vmem>>, %arg13: memref<8x2x16x64xf32, #tpu.memory_space<vmem>>, %arg14: memref<8x2x64xf32, #tpu.memory_space<vmem>>) attributes {dimension_semantics = [#tpu.dimension_semantics<parallel>], iteration_bounds = array<i64: 2>, scalar_prefetch = 0 : i64, scratch_operands = 4 : i64, tpu.core_type = #tpu.core_type<tc>, window_params = [{transform_indices = @transform_0, window_bounds = array<i64: 16, 32>}, {pipeline_mode = #tpu.pipeline_mode<synchronous>, transform_indices = @transform_1, window_bounds = array<i64: 32, 128>}, {pipeline_mode = #tpu.pipeline_mode<synchronous>, transform_indices = @transform_2, window_bounds = array<i64: 4, 64>}, {pipeline_mode = #tpu.pipeline_mode<synchronous>, transform_indices = @transform_3, window_bounds = array<i64: 1, 64>}, {pipeline_mode = #tpu.pipeline_mode<synchronous>, transform_indices = @transform_4, window_bounds = array<i64: 64, 96>}, {pipeline_mode = #tpu.pipeline_mode<synchronous>, transform_indices = @transform_5, window_bounds = array<i64: 1, 64>}, {pipeline_mode = #tpu.pipeline_mode<synchronous>, transform_indices = @transform_6, window_bounds = array<i64: 16, 64>}, {pipeline_mode = #tpu.pipeline_mode<synchronous>, transform_indices = @transform_7, window_bounds = array<i64: 1, 64>}, {pipeline_mode = #tpu.pipeline_mode<synchronous>, transform_indices = @transform_8, window_bounds = array<i64: 64, 32>}, {transform_indices = @transform_9, window_bounds = array<i64: 16, 32>}]} {
    %c0 = arith.constant 0 : index
    %c0_0 = arith.constant 0 : index
    %0 = vector.load %arg2[%c0, %c0_0] : memref<32x128xbf16, #tpu.memory_space<vmem>>, vector<32x128xbf16>
    %c0_1 = arith.constant 0 : index
    %c0_2 = arith.constant 0 : index
    %1 = vector.load %arg5[%c0_1, %c0_2] : memref<64x96xbf16, #tpu.memory_space<vmem>>, vector<64x96xbf16>
    %c0_3 = arith.constant 0 : index
    %c0_4 = arith.constant 0 : index
    %2 = vector.load %arg9[%c0_3, %c0_4] : memref<64x32xbf16, #tpu.memory_space<vmem>>, vector<64x32xbf16>
    %c0_5 = arith.constant 0 : index
    %c0_6 = arith.constant 0 : index
    %3 = vector.load %arg3[%c0_5, %c0_6] : memref<4x64xf32, #tpu.memory_space<vmem>>, vector<4x64xf32>
    %c0_7 = arith.constant 0 : index
    %c0_8 = arith.constant 0 : index
    %4 = vector.load %arg4[%c0_7, %c0_8] : memref<1x64xf32, #tpu.memory_space<vmem>>, vector<1x64xf32>
    %c0_9 = arith.constant 0 : index
    %c0_10 = arith.constant 0 : index
    %5 = vector.load %arg6[%c0_9, %c0_10] : memref<1x64xf32, #tpu.memory_space<vmem>>, vector<1x64xf32>
    %c0_11 = arith.constant 0 : index
    %c0_12 = arith.constant 0 : index
    %6 = vector.load %arg7[%c0_11, %c0_12] : memref<16x64xf32, #tpu.memory_space<vmem>>, vector<16x64xf32>
    %7 = math.exp %6 : vector<16x64xf32>
    %cst = arith.constant 0.000000e+00 : f32
    %8 = vector.broadcast %cst : f32 to vector<16x64xf32>
    %9 = arith.subf %8, %7 : vector<16x64xf32>
    %c0_13 = arith.constant 0 : index
    %c0_14 = arith.constant 0 : index
    %10 = vector.load %arg8[%c0_13, %c0_14] : memref<1x64xf32, #tpu.memory_space<vmem>>, vector<1x64xf32>
    %c0_15 = arith.constant 0 : index
    %c0_16 = arith.constant 0 : index
    %11 = vector.load %arg1[%c0_15, %c0_16] : memref<16x32xf32, #tpu.memory_space<vmem>>, vector<16x32xf32>
    %12 = arith.truncf %11 : vector<16x32xf32> to vector<16x32xbf16>
    %cst_17 = arith.constant dense<0.000000e+00> : vector<16x128xf32>
    %13 = tpu.matmul %12, %0, %cst_17 {dimension_numbers = #tpu.dot_dimension_numbers<[1], [0], [0], [1], [0, 0, 1, 1], [], []>} : vector<16x32xbf16>, vector<32x128xbf16>, vector<16x128xf32> -> vector<16x128xf32>
    %14 = vector.extract_strided_slice %13 {offsets = [0, 0], sizes = [16, 64], strides = [1, 1]} : vector<16x128xf32> to vector<16x64xf32>
    %15 = vector.extract_strided_slice %13 {offsets = [0, 64], sizes = [16, 64], strides = [1, 1]} : vector<16x128xf32> to vector<16x64xf32>
    %16 = tpu.iota {dimensions = array<i32: 0>} : vector<16x64xi32>
    %c8_i32 = arith.constant 8 : i32
    %c0_i32 = arith.constant 0 : i32
    %17 = arith.cmpi eq, %c8_i32, %c0_i32 : i32
    %c1_i32 = arith.constant 1 : i32
    %18 = arith.select %17, %c1_i32, %c8_i32 : i32
    %19 = vector.broadcast %18 : i32 to vector<16x64xi32>
    %20 = arith.remsi %16, %19 : vector<16x64xi32>
    %c0_i32_18 = arith.constant 0 : i32
    %21 = vector.broadcast %c0_i32_18 : i32 to vector<16x64xi32>
    %22 = arith.cmpi ne, %20, %21 : vector<16x64xi32>
    %c0_i32_19 = arith.constant 0 : i32
    %23 = vector.broadcast %c0_i32_19 : i32 to vector<16x64xi32>
    %24 = arith.cmpi slt, %20, %23 : vector<16x64xi32>
    %c0_i32_20 = arith.constant 0 : i32
    %25 = arith.cmpi slt, %18, %c0_i32_20 : i32
    %26 = vector.broadcast %25 : i1 to vector<16x64xi1>
    %27 = vector.broadcast %26 : vector<16x64xi1> to vector<16x64xi1>
    %28 = arith.xori %24, %27 : vector<16x64xi1>
    %29 = arith.andi %28, %22 : vector<16x64xi1>
    %30 = vector.broadcast %18 : i32 to vector<16x64xi32>
    %31 = arith.addi %20, %30 : vector<16x64xi32>
    %32 = arith.select %29, %31, %20 : vector<16x64xi1>, vector<16x64xi32>
    %33 = vector.shape_cast %4 : vector<1x64xf32> to vector<1x64xf32>
    %34 = vector.broadcast %33 : vector<1x64xf32> to vector<16x64xf32>
    %c3_i32 = arith.constant 3 : i32
    %35 = vector.broadcast %c3_i32 : i32 to vector<16x64xi32>
    %36 = arith.cmpi slt, %32, %35 : vector<16x64xi32>
    %c3_i32_21 = arith.constant 3 : i32
    %37 = tpu.dynamic_rotate %14 by %c3_i32_21 dim 0 : vector<16x64xf32>, i32 -> vector<16x64xf32>
    %cst_22 = arith.constant 0.000000e+00 : f32
    %38 = vector.broadcast %cst_22 : f32 to vector<16x64xf32>
    %39 = arith.select %36, %38, %37 : vector<16x64xi1>, vector<16x64xf32>
    %40 = vector.extract_strided_slice %3 {offsets = [0, 0], sizes = [1, 64], strides = [1, 1]} : vector<4x64xf32> to vector<1x64xf32>
    %41 = vector.broadcast %40 : vector<1x64xf32> to vector<16x64xf32>
    %42 = arith.mulf %39, %41 : vector<16x64xf32>
    %43 = arith.addf %34, %42 : vector<16x64xf32>
    %c2_i32 = arith.constant 2 : i32
    %44 = vector.broadcast %c2_i32 : i32 to vector<16x64xi32>
    %45 = arith.cmpi slt, %32, %44 : vector<16x64xi32>
    %c2_i32_23 = arith.constant 2 : i32
    %46 = tpu.dynamic_rotate %14 by %c2_i32_23 dim 0 : vector<16x64xf32>, i32 -> vector<16x64xf32>
    %cst_24 = arith.constant 0.000000e+00 : f32
    %47 = vector.broadcast %cst_24 : f32 to vector<16x64xf32>
    %48 = arith.select %45, %47, %46 : vector<16x64xi1>, vector<16x64xf32>
    %49 = vector.extract_strided_slice %3 {offsets = [1, 0], sizes = [1, 64], strides = [1, 1]} : vector<4x64xf32> to vector<1x64xf32>
    %50 = vector.broadcast %49 : vector<1x64xf32> to vector<16x64xf32>
    %51 = arith.mulf %48, %50 : vector<16x64xf32>
    %52 = arith.addf %43, %51 : vector<16x64xf32>
    %c1_i32_25 = arith.constant 1 : i32
    %53 = vector.broadcast %c1_i32_25 : i32 to vector<16x64xi32>
    %54 = arith.cmpi slt, %32, %53 : vector<16x64xi32>
    %c1_i32_26 = arith.constant 1 : i32
    %55 = tpu.dynamic_rotate %14 by %c1_i32_26 dim 0 : vector<16x64xf32>, i32 -> vector<16x64xf32>
    %cst_27 = arith.constant 0.000000e+00 : f32
    %56 = vector.broadcast %cst_27 : f32 to vector<16x64xf32>
    %57 = arith.select %54, %56, %55 : vector<16x64xi1>, vector<16x64xf32>
    %58 = vector.extract_strided_slice %3 {offsets = [2, 0], sizes = [1, 64], strides = [1, 1]} : vector<4x64xf32> to vector<1x64xf32>
    %59 = vector.broadcast %58 : vector<1x64xf32> to vector<16x64xf32>
    %60 = arith.mulf %57, %59 : vector<16x64xf32>
    %61 = arith.addf %52, %60 : vector<16x64xf32>
    %62 = vector.extract_strided_slice %3 {offsets = [3, 0], sizes = [1, 64], strides = [1, 1]} : vector<4x64xf32> to vector<1x64xf32>
    %63 = vector.broadcast %62 : vector<1x64xf32> to vector<16x64xf32>
    %64 = arith.mulf %14, %63 : vector<16x64xf32>
    %65 = arith.addf %61, %64 : vector<16x64xf32>
    %cst_28 = arith.constant 5.000000e-01 : f32
    %66 = vector.broadcast %cst_28 : f32 to vector<16x64xf32>
    %67 = arith.mulf %66, %65 : vector<16x64xf32>
    %cst_29 = arith.constant 5.000000e-01 : f32
    %68 = vector.broadcast %cst_29 : f32 to vector<16x64xf32>
    %69 = arith.mulf %68, %65 : vector<16x64xf32>
    %70 = math.tanh %69 : vector<16x64xf32>
    %cst_30 = arith.constant 1.000000e+00 : f32
    %71 = vector.broadcast %cst_30 : f32 to vector<16x64xf32>
    %72 = arith.addf %71, %70 : vector<16x64xf32>
    %73 = arith.mulf %67, %72 : vector<16x64xf32>
    %74 = arith.truncf %73 : vector<16x64xf32> to vector<16x64xbf16>
    %cst_31 = arith.constant dense<0.000000e+00> : vector<16x96xf32>
    %75 = tpu.matmul %74, %1, %cst_31 {dimension_numbers = #tpu.dot_dimension_numbers<[1], [0], [0], [1], [0, 0, 1, 1], [], []>} : vector<16x64xbf16>, vector<64x96xbf16>, vector<16x96xf32> -> vector<16x96xf32>
    %76 = vector.extract_strided_slice %75 {offsets = [0, 0], sizes = [16, 64], strides = [1, 1]} : vector<16x96xf32> to vector<16x64xf32>
    %77 = vector.extract_strided_slice %75 {offsets = [0, 64], sizes = [16, 16], strides = [1, 1]} : vector<16x96xf32> to vector<16x16xf32>
    %78 = vector.extract_strided_slice %75 {offsets = [0, 80], sizes = [16, 16], strides = [1, 1]} : vector<16x96xf32> to vector<16x16xf32>
    %79 = vector.broadcast %5 : vector<1x64xf32> to vector<16x64xf32>
    %80 = arith.addf %76, %79 : vector<16x64xf32>
    %cst_32 = arith.constant 2.000000e+01 : f32
    %81 = vector.broadcast %cst_32 : f32 to vector<16x64xf32>
    %82 = arith.cmpf ogt, %80, %81 : vector<16x64xf32>
    %cst_33 = arith.constant 2.000000e+01 : f32
    %83 = vector.broadcast %cst_33 : f32 to vector<16x64xf32>
    %84 = arith.minimumf %80, %83 : vector<16x64xf32>
    %85 = math.exp %84 : vector<16x64xf32>
    %86 = math.log1p %85 : vector<16x64xf32>
    %87 = arith.select %82, %80, %86 : vector<16x64xi1>, vector<16x64xf32>
    %cst_34 = arith.constant dense<0.000000e+00> : vector<16xf32>
    %88 = vector.multi_reduction <add>, %87, %cst_34 [1] : vector<16x64xf32> to vector<16xf32>
    %89 = vector.shape_cast %88 : vector<16xf32> to vector<16x1xf32>
    %90 = vector.broadcast %89 : vector<16x1xf32> to vector<16x64xf32>
    %91 = arith.mulf %90, %73 : vector<16x64xf32>
    %cst_35 = arith.constant 0.000000e+00 : f32
    %92 = vector.broadcast %cst_35 : f32 to vector<2x16x64xf32>
    %93 = vector.extract_strided_slice %89 {offsets = [0, 0], sizes = [8, 1], strides = [1, 1]} : vector<16x1xf32> to vector<8x1xf32>
    %94 = vector.extract_strided_slice %91 {offsets = [0, 0], sizes = [8, 64], strides = [1, 1]} : vector<16x64xf32> to vector<8x64xf32>
    %95 = vector.extract_strided_slice %77 {offsets = [0, 0], sizes = [8, 16], strides = [1, 1]} : vector<16x16xf32> to vector<8x16xf32>
    %96 = vector.extract_strided_slice %78 {offsets = [0, 0], sizes = [8, 16], strides = [1, 1]} : vector<16x16xf32> to vector<8x16xf32>
    %97 = vector.shape_cast %93 : vector<8x1xf32> to vector<8x1x1xf32>
    %98 = vector.shape_cast %9 : vector<16x64xf32> to vector<1x16x64xf32>
    %99 = vector.broadcast %97 : vector<8x1x1xf32> to vector<8x16x64xf32>
    %100 = vector.broadcast %98 : vector<1x16x64xf32> to vector<8x16x64xf32>
    %101 = arith.mulf %99, %100 : vector<8x16x64xf32>
    %102 = math.exp %101 : vector<8x16x64xf32>
    %c0_36 = arith.constant 0 : index
    %c0_37 = arith.constant 0 : index
    %c0_38 = arith.constant 0 : index
    %c0_39 = arith.constant 0 : index
    %103 = vector.load %arg11[%c0_36, %c0_37, %c0_38, %c0_39] : memref<8x2x16x64xf32, #tpu.memory_space<vmem>>, vector<8x1x16x64xf32>
    %104 = vector.shape_cast %103 : vector<8x1x16x64xf32> to vector<8x16x64xf32>
    %105 = vector.shape_cast %102 : vector<8x16x64xf32> to vector<8x1x16x64xf32>
    tpu.vector_store %arg11[%c0_36, %c0_37, %c0_38, %c0_39], %105 {strides = array<i32>} : memref<8x2x16x64xf32, #tpu.memory_space<vmem>>, vector<8x1x16x64xf32>,
    %106 = vector.shape_cast %95 : vector<8x16xf32> to vector<8x16x1xf32>
    %107 = vector.shape_cast %94 : vector<8x64xf32> to vector<8x1x64xf32>
    %108 = vector.broadcast %106 : vector<8x16x1xf32> to vector<8x16x64xf32>
    %109 = vector.broadcast %107 : vector<8x1x64xf32> to vector<8x16x64xf32>
    %110 = arith.mulf %108, %109 : vector<8x16x64xf32>
    %c0_40 = arith.constant 0 : index
    %c0_41 = arith.constant 0 : index
    %c0_42 = arith.constant 0 : index
    %c0_43 = arith.constant 0 : index
    %111 = vector.load %arg12[%c0_40, %c0_41, %c0_42, %c0_43] : memref<8x2x16x64xf32, #tpu.memory_space<vmem>>, vector<8x1x16x64xf32>
    %112 = vector.shape_cast %111 : vector<8x1x16x64xf32> to vector<8x16x64xf32>
    %113 = vector.shape_cast %110 : vector<8x16x64xf32> to vector<8x1x16x64xf32>
    tpu.vector_store %arg12[%c0_40, %c0_41, %c0_42, %c0_43], %113 {strides = array<i32>} : memref<8x2x16x64xf32, #tpu.memory_space<vmem>>, vector<8x1x16x64xf32>,
    %114 = vector.shape_cast %96 : vector<8x16xf32> to vector<8x16x1xf32>
    %115 = vector.shape_cast %114 : vector<8x16x1xf32> to vector<8x16x1xf32>
    %116 = vector.broadcast %115 : vector<8x16x1xf32> to vector<8x16x64xf32>
    %c0_44 = arith.constant 0 : index
    %c0_45 = arith.constant 0 : index
    %c0_46 = arith.constant 0 : index
    %c0_47 = arith.constant 0 : index
    %117 = vector.load %arg13[%c0_44, %c0_45, %c0_46, %c0_47] : memref<8x2x16x64xf32, #tpu.memory_space<vmem>>, vector<8x1x16x64xf32>
    %118 = vector.shape_cast %117 : vector<8x1x16x64xf32> to vector<8x16x64xf32>
    %119 = vector.shape_cast %116 : vector<8x16x64xf32> to vector<8x1x16x64xf32>
    tpu.vector_store %arg13[%c0_44, %c0_45, %c0_46, %c0_47], %119 {strides = array<i32>} : memref<8x2x16x64xf32, #tpu.memory_space<vmem>>, vector<8x1x16x64xf32>,
    %120 = vector.extract_strided_slice %89 {offsets = [8, 0], sizes = [8, 1], strides = [1, 1]} : vector<16x1xf32> to vector<8x1xf32>
    %121 = vector.extract_strided_slice %91 {offsets = [8, 0], sizes = [8, 64], strides = [1, 1]} : vector<16x64xf32> to vector<8x64xf32>
    %122 = vector.extract_strided_slice %77 {offsets = [8, 0], sizes = [8, 16], strides = [1, 1]} : vector<16x16xf32> to vector<8x16xf32>
    %123 = vector.extract_strided_slice %78 {offsets = [8, 0], sizes = [8, 16], strides = [1, 1]} : vector<16x16xf32> to vector<8x16xf32>
    %124 = vector.shape_cast %120 : vector<8x1xf32> to vector<8x1x1xf32>
    %125 = vector.shape_cast %9 : vector<16x64xf32> to vector<1x16x64xf32>
    %126 = vector.broadcast %124 : vector<8x1x1xf32> to vector<8x16x64xf32>
    %127 = vector.broadcast %125 : vector<1x16x64xf32> to vector<8x16x64xf32>
    %128 = arith.mulf %126, %127 : vector<8x16x64xf32>
    %129 = math.exp %128 : vector<8x16x64xf32>
    %c0_48 = arith.constant 0 : index
    %c1 = arith.constant 1 : index
    %c0_49 = arith.constant 0 : index
    %c0_50 = arith.constant 0 : index
    %130 = vector.load %arg11[%c0_48, %c1, %c0_49, %c0_50] : memref<8x2x16x64xf32, #tpu.memory_space<vmem>>, vector<8x1x16x64xf32>
    %131 = vector.shape_cast %130 : vector<8x1x16x64xf32> to vector<8x16x64xf32>
    %132 = vector.shape_cast %129 : vector<8x16x64xf32> to vector<8x1x16x64xf32>
    tpu.vector_store %arg11[%c0_48, %c1, %c0_49, %c0_50], %132 {strides = array<i32>} : memref<8x2x16x64xf32, #tpu.memory_space<vmem>>, vector<8x1x16x64xf32>,
    %133 = vector.shape_cast %122 : vector<8x16xf32> to vector<8x16x1xf32>
    %134 = vector.shape_cast %121 : vector<8x64xf32> to vector<8x1x64xf32>
    %135 = vector.broadcast %133 : vector<8x16x1xf32> to vector<8x16x64xf32>
    %136 = vector.broadcast %134 : vector<8x1x64xf32> to vector<8x16x64xf32>
    %137 = arith.mulf %135, %136 : vector<8x16x64xf32>
    %c0_51 = arith.constant 0 : index
    %c1_52 = arith.constant 1 : index
    %c0_53 = arith.constant 0 : index
    %c0_54 = arith.constant 0 : index
    %138 = vector.load %arg12[%c0_51, %c1_52, %c0_53, %c0_54] : memref<8x2x16x64xf32, #tpu.memory_space<vmem>>, vector<8x1x16x64xf32>
    %139 = vector.shape_cast %138 : vector<8x1x16x64xf32> to vector<8x16x64xf32>
    %140 = vector.shape_cast %137 : vector<8x16x64xf32> to vector<8x1x16x64xf32>
    tpu.vector_store %arg12[%c0_51, %c1_52, %c0_53, %c0_54], %140 {strides = array<i32>} : memref<8x2x16x64xf32, #tpu.memory_space<vmem>>, vector<8x1x16x64xf32>,
    %141 = vector.shape_cast %123 : vector<8x16xf32> to vector<8x16x1xf32>
    %142 = vector.shape_cast %141 : vector<8x16x1xf32> to vector<8x16x1xf32>
    %143 = vector.broadcast %142 : vector<8x16x1xf32> to vector<8x16x64xf32>
    %c0_55 = arith.constant 0 : index
    %c1_56 = arith.constant 1 : index
    %c0_57 = arith.constant 0 : index
    %c0_58 = arith.constant 0 : index
    %144 = vector.load %arg13[%c0_55, %c1_56, %c0_57, %c0_58] : memref<8x2x16x64xf32, #tpu.memory_space<vmem>>, vector<8x1x16x64xf32>
    %145 = vector.shape_cast %144 : vector<8x1x16x64xf32> to vector<8x16x64xf32>
    %146 = vector.shape_cast %143 : vector<8x16x64xf32> to vector<8x1x16x64xf32>
    tpu.vector_store %arg13[%c0_55, %c1_56, %c0_57, %c0_58], %146 {strides = array<i32>} : memref<8x2x16x64xf32, #tpu.memory_space<vmem>>, vector<8x1x16x64xf32>,
    %c0_i32_59 = arith.constant 0 : i32
    %147 = arith.index_cast %c0_i32_59 : i32 to index
    %c0_60 = arith.constant 0 : index
    %c0_61 = arith.constant 0 : index
    %c0_62 = arith.constant 0 : index
    %148 = vector.load %arg11[%147, %c0_60, %c0_61, %c0_62] : memref<8x2x16x64xf32, #tpu.memory_space<vmem>>, vector<1x2x16x64xf32>
    %149 = vector.shape_cast %148 : vector<1x2x16x64xf32> to vector<2x16x64xf32>
    %150 = arith.mulf %149, %92 : vector<2x16x64xf32>
    %151 = arith.index_cast %c0_i32_59 : i32 to index
    %c0_63 = arith.constant 0 : index
    %c0_64 = arith.constant 0 : index
    %c0_65 = arith.constant 0 : index
    %152 = vector.load %arg12[%151, %c0_63, %c0_64, %c0_65] : memref<8x2x16x64xf32, #tpu.memory_space<vmem>>, vector<1x2x16x64xf32>
    %153 = vector.shape_cast %152 : vector<1x2x16x64xf32> to vector<2x16x64xf32>
    %154 = arith.addf %150, %153 : vector<2x16x64xf32>
    %155 = arith.index_cast %c0_i32_59 : i32 to index
    %c0_66 = arith.constant 0 : index
    %c0_67 = arith.constant 0 : index
    %c0_68 = arith.constant 0 : index
    %156 = vector.load %arg13[%155, %c0_66, %c0_67, %c0_68] : memref<8x2x16x64xf32, #tpu.memory_space<vmem>>, vector<1x2x16x64xf32>
    %157 = vector.shape_cast %156 : vector<1x2x16x64xf32> to vector<2x16x64xf32>
    %158 = arith.mulf %157, %154 : vector<2x16x64xf32>
    %cst_69 = arith.constant dense<0.000000e+00> : vector<2x64xf32>
    %159 = vector.multi_reduction <add>, %158, %cst_69 [1] : vector<2x16x64xf32> to vector<2x64xf32>
    %c0_i32_70 = arith.constant 0 : i32
    %160 = arith.addi %c0_i32_70, %c0_i32_59 : i32
    %161 = arith.index_cast %160 : i32 to index
    %c0_71 = arith.constant 0 : index
    %c0_72 = arith.constant 0 : index
    %162 = vector.load %arg14[%161, %c0_71, %c0_72] : memref<8x2x64xf32, #tpu.memory_space<vmem>>, vector<1x2x64xf32>
    %163 = vector.shape_cast %162 : vector<1x2x64xf32> to vector<2x64xf32>
    %164 = vector.shape_cast %159 : vector<2x64xf32> to vector<1x2x64xf32>
    tpu.vector_store %arg14[%161, %c0_71, %c0_72], %164 {strides = array<i32>} : memref<8x2x64xf32, #tpu.memory_space<vmem>>, vector<1x2x64xf32>,
    %c1_i32_73 = arith.constant 1 : i32
    %165 = arith.index_cast %c1_i32_73 : i32 to index
    %c0_74 = arith.constant 0 : index
    %c0_75 = arith.constant 0 : index
    %c0_76 = arith.constant 0 : index
    %166 = vector.load %arg11[%165, %c0_74, %c0_75, %c0_76] : memref<8x2x16x64xf32, #tpu.memory_space<vmem>>, vector<1x2x16x64xf32>
    %167 = vector.shape_cast %166 : vector<1x2x16x64xf32> to vector<2x16x64xf32>
    %168 = arith.mulf %167, %154 : vector<2x16x64xf32>
    %169 = arith.index_cast %c1_i32_73 : i32 to index
    %c0_77 = arith.constant 0 : index
    %c0_78 = arith.constant 0 : index
    %c0_79 = arith.constant 0 : index
    %170 = vector.load %arg12[%169, %c0_77, %c0_78, %c0_79] : memref<8x2x16x64xf32, #tpu.memory_space<vmem>>, vector<1x2x16x64xf32>
    %171 = vector.shape_cast %170 : vector<1x2x16x64xf32> to vector<2x16x64xf32>
    %172 = arith.addf %168, %171 : vector<2x16x64xf32>
    %173 = arith.index_cast %c1_i32_73 : i32 to index
    %c0_80 = arith.constant 0 : index
    %c0_81 = arith.constant 0 : index
    %c0_82 = arith.constant 0 : index
    %174 = vector.load %arg13[%173, %c0_80, %c0_81, %c0_82] : memref<8x2x16x64xf32, #tpu.memory_space<vmem>>, vector<1x2x16x64xf32>
    %175 = vector.shape_cast %174 : vector<1x2x16x64xf32> to vector<2x16x64xf32>
    %176 = arith.mulf %175, %172 : vector<2x16x64xf32>
    %cst_83 = arith.constant dense<0.000000e+00> : vector<2x64xf32>
    %177 = vector.multi_reduction <add>, %176, %cst_83 [1] : vector<2x16x64xf32> to vector<2x64xf32>
    %c0_i32_84 = arith.constant 0 : i32
    %178 = arith.addi %c0_i32_84, %c1_i32_73 : i32
    %179 = arith.index_cast %178 : i32 to index
    %c0_85 = arith.constant 0 : index
    %c0_86 = arith.constant 0 : index
    %180 = vector.load %arg14[%179, %c0_85, %c0_86] : memref<8x2x64xf32, #tpu.memory_space<vmem>>, vector<1x2x64xf32>
    %181 = vector.shape_cast %180 : vector<1x2x64xf32> to vector<2x64xf32>
    %182 = vector.shape_cast %177 : vector<2x64xf32> to vector<1x2x64xf32>
    tpu.vector_store %arg14[%179, %c0_85, %c0_86], %182 {strides = array<i32>} : memref<8x2x64xf32, #tpu.memory_space<vmem>>, vector<1x2x64xf32>,
    %c2_i32_87 = arith.constant 2 : i32
    %183 = arith.index_cast %c2_i32_87 : i32 to index
    %c0_88 = arith.constant 0 : index
    %c0_89 = arith.constant 0 : index
    %c0_90 = arith.constant 0 : index
    %184 = vector.load %arg11[%183, %c0_88, %c0_89, %c0_90] : memref<8x2x16x64xf32, #tpu.memory_space<vmem>>, vector<1x2x16x64xf32>
    %185 = vector.shape_cast %184 : vector<1x2x16x64xf32> to vector<2x16x64xf32>
    %186 = arith.mulf %185, %172 : vector<2x16x64xf32>
    %187 = arith.index_cast %c2_i32_87 : i32 to index
    %c0_91 = arith.constant 0 : index
    %c0_92 = arith.constant 0 : index
    %c0_93 = arith.constant 0 : index
    %188 = vector.load %arg12[%187, %c0_91, %c0_92, %c0_93] : memref<8x2x16x64xf32, #tpu.memory_space<vmem>>, vector<1x2x16x64xf32>
    %189 = vector.shape_cast %188 : vector<1x2x16x64xf32> to vector<2x16x64xf32>
    %190 = arith.addf %186, %189 : vector<2x16x64xf32>
    %191 = arith.index_cast %c2_i32_87 : i32 to index
    %c0_94 = arith.constant 0 : index
    %c0_95 = arith.constant 0 : index
    %c0_96 = arith.constant 0 : index
    %192 = vector.load %arg13[%191, %c0_94, %c0_95, %c0_96] : memref<8x2x16x64xf32, #tpu.memory_space<vmem>>, vector<1x2x16x64xf32>
    %193 = vector.shape_cast %192 : vector<1x2x16x64xf32> to vector<2x16x64xf32>
    %194 = arith.mulf %193, %190 : vector<2x16x64xf32>
    %cst_97 = arith.constant dense<0.000000e+00> : vector<2x64xf32>
    %195 = vector.multi_reduction <add>, %194, %cst_97 [1] : vector<2x16x64xf32> to vector<2x64xf32>
    %c0_i32_98 = arith.constant 0 : i32
    %196 = arith.addi %c0_i32_98, %c2_i32_87 : i32
    %197 = arith.index_cast %196 : i32 to index
    %c0_99 = arith.constant 0 : index
    %c0_100 = arith.constant 0 : index
    %198 = vector.load %arg14[%197, %c0_99, %c0_100] : memref<8x2x64xf32, #tpu.memory_space<vmem>>, vector<1x2x64xf32>
    %199 = vector.shape_cast %198 : vector<1x2x64xf32> to vector<2x64xf32>
    %200 = vector.shape_cast %195 : vector<2x64xf32> to vector<1x2x64xf32>
    tpu.vector_store %arg14[%197, %c0_99, %c0_100], %200 {strides = array<i32>} : memref<8x2x64xf32, #tpu.memory_space<vmem>>, vector<1x2x64xf32>,
    %c3_i32_101 = arith.constant 3 : i32
    %201 = arith.index_cast %c3_i32_101 : i32 to index
    %c0_102 = arith.constant 0 : index
    %c0_103 = arith.constant 0 : index
    %c0_104 = arith.constant 0 : index
    %202 = vector.load %arg11[%201, %c0_102, %c0_103, %c0_104] : memref<8x2x16x64xf32, #tpu.memory_space<vmem>>, vector<1x2x16x64xf32>
    %203 = vector.shape_cast %202 : vector<1x2x16x64xf32> to vector<2x16x64xf32>
    %204 = arith.mulf %203, %190 : vector<2x16x64xf32>
    %205 = arith.index_cast %c3_i32_101 : i32 to index
    %c0_105 = arith.constant 0 : index
    %c0_106 = arith.constant 0 : index
    %c0_107 = arith.constant 0 : index
    %206 = vector.load %arg12[%205, %c0_105, %c0_106, %c0_107] : memref<8x2x16x64xf32, #tpu.memory_space<vmem>>, vector<1x2x16x64xf32>
    %207 = vector.shape_cast %206 : vector<1x2x16x64xf32> to vector<2x16x64xf32>
    %208 = arith.addf %204, %207 : vector<2x16x64xf32>
    %209 = arith.index_cast %c3_i32_101 : i32 to index
    %c0_108 = arith.constant 0 : index
    %c0_109 = arith.constant 0 : index
    %c0_110 = arith.constant 0 : index
    %210 = vector.load %arg13[%209, %c0_108, %c0_109, %c0_110] : memref<8x2x16x64xf32, #tpu.memory_space<vmem>>, vector<1x2x16x64xf32>
    %211 = vector.shape_cast %210 : vector<1x2x16x64xf32> to vector<2x16x64xf32>
    %212 = arith.mulf %211, %208 : vector<2x16x64xf32>
    %cst_111 = arith.constant dense<0.000000e+00> : vector<2x64xf32>
    %213 = vector.multi_reduction <add>, %212, %cst_111 [1] : vector<2x16x64xf32> to vector<2x64xf32>
    %c0_i32_112 = arith.constant 0 : i32
    %214 = arith.addi %c0_i32_112, %c3_i32_101 : i32
    %215 = arith.index_cast %214 : i32 to index
    %c0_113 = arith.constant 0 : index
    %c0_114 = arith.constant 0 : index
    %216 = vector.load %arg14[%215, %c0_113, %c0_114] : memref<8x2x64xf32, #tpu.memory_space<vmem>>, vector<1x2x64xf32>
    %217 = vector.shape_cast %216 : vector<1x2x64xf32> to vector<2x64xf32>
    %218 = vector.shape_cast %213 : vector<2x64xf32> to vector<1x2x64xf32>
    tpu.vector_store %arg14[%215, %c0_113, %c0_114], %218 {strides = array<i32>} : memref<8x2x64xf32, #tpu.memory_space<vmem>>, vector<1x2x64xf32>,
    %c4_i32 = arith.constant 4 : i32
    %219 = arith.index_cast %c4_i32 : i32 to index
    %c0_115 = arith.constant 0 : index
    %c0_116 = arith.constant 0 : index
    %c0_117 = arith.constant 0 : index
    %220 = vector.load %arg11[%219, %c0_115, %c0_116, %c0_117] : memref<8x2x16x64xf32, #tpu.memory_space<vmem>>, vector<1x2x16x64xf32>
    %221 = vector.shape_cast %220 : vector<1x2x16x64xf32> to vector<2x16x64xf32>
    %222 = arith.mulf %221, %208 : vector<2x16x64xf32>
    %223 = arith.index_cast %c4_i32 : i32 to index
    %c0_118 = arith.constant 0 : index
    %c0_119 = arith.constant 0 : index
    %c0_120 = arith.constant 0 : index
    %224 = vector.load %arg12[%223, %c0_118, %c0_119, %c0_120] : memref<8x2x16x64xf32, #tpu.memory_space<vmem>>, vector<1x2x16x64xf32>
    %225 = vector.shape_cast %224 : vector<1x2x16x64xf32> to vector<2x16x64xf32>
    %226 = arith.addf %222, %225 : vector<2x16x64xf32>
    %227 = arith.index_cast %c4_i32 : i32 to index
    %c0_121 = arith.constant 0 : index
    %c0_122 = arith.constant 0 : index
    %c0_123 = arith.constant 0 : index
    %228 = vector.load %arg13[%227, %c0_121, %c0_122, %c0_123] : memref<8x2x16x64xf32, #tpu.memory_space<vmem>>, vector<1x2x16x64xf32>
    %229 = vector.shape_cast %228 : vector<1x2x16x64xf32> to vector<2x16x64xf32>
    %230 = arith.mulf %229, %226 : vector<2x16x64xf32>
    %cst_124 = arith.constant dense<0.000000e+00> : vector<2x64xf32>
    %231 = vector.multi_reduction <add>, %230, %cst_124 [1] : vector<2x16x64xf32> to vector<2x64xf32>
    %c0_i32_125 = arith.constant 0 : i32
    %232 = arith.addi %c0_i32_125, %c4_i32 : i32
    %233 = arith.index_cast %232 : i32 to index
    %c0_126 = arith.constant 0 : index
    %c0_127 = arith.constant 0 : index
    %234 = vector.load %arg14[%233, %c0_126, %c0_127] : memref<8x2x64xf32, #tpu.memory_space<vmem>>, vector<1x2x64xf32>
    %235 = vector.shape_cast %234 : vector<1x2x64xf32> to vector<2x64xf32>
    %236 = vector.shape_cast %231 : vector<2x64xf32> to vector<1x2x64xf32>
    tpu.vector_store %arg14[%233, %c0_126, %c0_127], %236 {strides = array<i32>} : memref<8x2x64xf32, #tpu.memory_space<vmem>>, vector<1x2x64xf32>,
    %c5_i32 = arith.constant 5 : i32
    %237 = arith.index_cast %c5_i32 : i32 to index
    %c0_128 = arith.constant 0 : index
    %c0_129 = arith.constant 0 : index
    %c0_130 = arith.constant 0 : index
    %238 = vector.load %arg11[%237, %c0_128, %c0_129, %c0_130] : memref<8x2x16x64xf32, #tpu.memory_space<vmem>>, vector<1x2x16x64xf32>
    %239 = vector.shape_cast %238 : vector<1x2x16x64xf32> to vector<2x16x64xf32>
    %240 = arith.mulf %239, %226 : vector<2x16x64xf32>
    %241 = arith.index_cast %c5_i32 : i32 to index
    %c0_131 = arith.constant 0 : index
    %c0_132 = arith.constant 0 : index
    %c0_133 = arith.constant 0 : index
    %242 = vector.load %arg12[%241, %c0_131, %c0_132, %c0_133] : memref<8x2x16x64xf32, #tpu.memory_space<vmem>>, vector<1x2x16x64xf32>
    %243 = vector.shape_cast %242 : vector<1x2x16x64xf32> to vector<2x16x64xf32>
    %244 = arith.addf %240, %243 : vector<2x16x64xf32>
    %245 = arith.index_cast %c5_i32 : i32 to index
    %c0_134 = arith.constant 0 : index
    %c0_135 = arith.constant 0 : index
    %c0_136 = arith.constant 0 : index
    %246 = vector.load %arg13[%245, %c0_134, %c0_135, %c0_136] : memref<8x2x16x64xf32, #tpu.memory_space<vmem>>, vector<1x2x16x64xf32>
    %247 = vector.shape_cast %246 : vector<1x2x16x64xf32> to vector<2x16x64xf32>
    %248 = arith.mulf %247, %244 : vector<2x16x64xf32>
    %cst_137 = arith.constant dense<0.000000e+00> : vector<2x64xf32>
    %249 = vector.multi_reduction <add>, %248, %cst_137 [1] : vector<2x16x64xf32> to vector<2x64xf32>
    %c0_i32_138 = arith.constant 0 : i32
    %250 = arith.addi %c0_i32_138, %c5_i32 : i32
    %251 = arith.index_cast %250 : i32 to index
    %c0_139 = arith.constant 0 : index
    %c0_140 = arith.constant 0 : index
    %252 = vector.load %arg14[%251, %c0_139, %c0_140] : memref<8x2x64xf32, #tpu.memory_space<vmem>>, vector<1x2x64xf32>
    %253 = vector.shape_cast %252 : vector<1x2x64xf32> to vector<2x64xf32>
    %254 = vector.shape_cast %249 : vector<2x64xf32> to vector<1x2x64xf32>
    tpu.vector_store %arg14[%251, %c0_139, %c0_140], %254 {strides = array<i32>} : memref<8x2x64xf32, #tpu.memory_space<vmem>>, vector<1x2x64xf32>,
    %c6_i32 = arith.constant 6 : i32
    %255 = arith.index_cast %c6_i32 : i32 to index
    %c0_141 = arith.constant 0 : index
    %c0_142 = arith.constant 0 : index
    %c0_143 = arith.constant 0 : index
    %256 = vector.load %arg11[%255, %c0_141, %c0_142, %c0_143] : memref<8x2x16x64xf32, #tpu.memory_space<vmem>>, vector<1x2x16x64xf32>
    %257 = vector.shape_cast %256 : vector<1x2x16x64xf32> to vector<2x16x64xf32>
    %258 = arith.mulf %257, %244 : vector<2x16x64xf32>
    %259 = arith.index_cast %c6_i32 : i32 to index
    %c0_144 = arith.constant 0 : index
    %c0_145 = arith.constant 0 : index
    %c0_146 = arith.constant 0 : index
    %260 = vector.load %arg12[%259, %c0_144, %c0_145, %c0_146] : memref<8x2x16x64xf32, #tpu.memory_space<vmem>>, vector<1x2x16x64xf32>
    %261 = vector.shape_cast %260 : vector<1x2x16x64xf32> to vector<2x16x64xf32>
    %262 = arith.addf %258, %261 : vector<2x16x64xf32>
    %263 = arith.index_cast %c6_i32 : i32 to index
    %c0_147 = arith.constant 0 : index
    %c0_148 = arith.constant 0 : index
    %c0_149 = arith.constant 0 : index
    %264 = vector.load %arg13[%263, %c0_147, %c0_148, %c0_149] : memref<8x2x16x64xf32, #tpu.memory_space<vmem>>, vector<1x2x16x64xf32>
    %265 = vector.shape_cast %264 : vector<1x2x16x64xf32> to vector<2x16x64xf32>
    %266 = arith.mulf %265, %262 : vector<2x16x64xf32>
    %cst_150 = arith.constant dense<0.000000e+00> : vector<2x64xf32>
    %267 = vector.multi_reduction <add>, %266, %cst_150 [1] : vector<2x16x64xf32> to vector<2x64xf32>
    %c0_i32_151 = arith.constant 0 : i32
    %268 = arith.addi %c0_i32_151, %c6_i32 : i32
    %269 = arith.index_cast %268 : i32 to index
    %c0_152 = arith.constant 0 : index
    %c0_153 = arith.constant 0 : index
    %270 = vector.load %arg14[%269, %c0_152, %c0_153] : memref<8x2x64xf32, #tpu.memory_space<vmem>>, vector<1x2x64xf32>
    %271 = vector.shape_cast %270 : vector<1x2x64xf32> to vector<2x64xf32>
    %272 = vector.shape_cast %267 : vector<2x64xf32> to vector<1x2x64xf32>
    tpu.vector_store %arg14[%269, %c0_152, %c0_153], %272 {strides = array<i32>} : memref<8x2x64xf32, #tpu.memory_space<vmem>>, vector<1x2x64xf32>,
    %c7_i32 = arith.constant 7 : i32
    %273 = arith.index_cast %c7_i32 : i32 to index
    %c0_154 = arith.constant 0 : index
    %c0_155 = arith.constant 0 : index
    %c0_156 = arith.constant 0 : index
    %274 = vector.load %arg11[%273, %c0_154, %c0_155, %c0_156] : memref<8x2x16x64xf32, #tpu.memory_space<vmem>>, vector<1x2x16x64xf32>
    %275 = vector.shape_cast %274 : vector<1x2x16x64xf32> to vector<2x16x64xf32>
    %276 = arith.mulf %275, %262 : vector<2x16x64xf32>
    %277 = arith.index_cast %c7_i32 : i32 to index
    %c0_157 = arith.constant 0 : index
    %c0_158 = arith.constant 0 : index
    %c0_159 = arith.constant 0 : index
    %278 = vector.load %arg12[%277, %c0_157, %c0_158, %c0_159] : memref<8x2x16x64xf32, #tpu.memory_space<vmem>>, vector<1x2x16x64xf32>
    %279 = vector.shape_cast %278 : vector<1x2x16x64xf32> to vector<2x16x64xf32>
    %280 = arith.addf %276, %279 : vector<2x16x64xf32>
    %281 = arith.index_cast %c7_i32 : i32 to index
    %c0_160 = arith.constant 0 : index
    %c0_161 = arith.constant 0 : index
    %c0_162 = arith.constant 0 : index
    %282 = vector.load %arg13[%281, %c0_160, %c0_161, %c0_162] : memref<8x2x16x64xf32, #tpu.memory_space<vmem>>, vector<1x2x16x64xf32>
    %283 = vector.shape_cast %282 : vector<1x2x16x64xf32> to vector<2x16x64xf32>
    %284 = arith.mulf %283, %280 : vector<2x16x64xf32>
    %cst_163 = arith.constant dense<0.000000e+00> : vector<2x64xf32>
    %285 = vector.multi_reduction <add>, %284, %cst_163 [1] : vector<2x16x64xf32> to vector<2x64xf32>
    %c0_i32_164 = arith.constant 0 : i32
    %286 = arith.addi %c0_i32_164, %c7_i32 : i32
    %287 = arith.index_cast %286 : i32 to index
    %c0_165 = arith.constant 0 : index
    %c0_166 = arith.constant 0 : index
    %288 = vector.load %arg14[%287, %c0_165, %c0_166] : memref<8x2x64xf32, #tpu.memory_space<vmem>>, vector<1x2x64xf32>
    %289 = vector.shape_cast %288 : vector<1x2x64xf32> to vector<2x64xf32>
    %290 = vector.shape_cast %285 : vector<2x64xf32> to vector<1x2x64xf32>
    tpu.vector_store %arg14[%287, %c0_165, %c0_166], %290 {strides = array<i32>} : memref<8x2x64xf32, #tpu.memory_space<vmem>>, vector<1x2x64xf32>,
    %c8_i32_167 = arith.constant 8 : i32
    %c0_168 = arith.constant 0 : index
    %c0_169 = arith.constant 0 : index
    %c0_170 = arith.constant 0 : index
    %291 = vector.load %arg14[%c0_168, %c0_169, %c0_170] : memref<8x2x64xf32, #tpu.memory_space<vmem>>, vector<8x1x64xf32>
    %292 = vector.shape_cast %291 : vector<8x1x64xf32> to vector<8x64xf32>
    %c0_171 = arith.constant 0 : index
    %c1_172 = arith.constant 1 : index
    %c0_173 = arith.constant 0 : index
    %293 = vector.load %arg14[%c0_171, %c1_172, %c0_173] : memref<8x2x64xf32, #tpu.memory_space<vmem>>, vector<8x1x64xf32>
    %294 = vector.shape_cast %293 : vector<8x1x64xf32> to vector<8x64xf32>
    %295 = tpu.concatenate %292, %294 in 0 : vector<8x64xf32>, vector<8x64xf32> -> vector<16x64xf32>
    %296 = vector.broadcast %10 : vector<1x64xf32> to vector<16x64xf32>
    %297 = arith.mulf %73, %296 : vector<16x64xf32>
    %298 = arith.addf %295, %297 : vector<16x64xf32>
    %cst_174 = arith.constant 5.000000e-01 : f32
    %299 = vector.broadcast %cst_174 : f32 to vector<16x64xf32>
    %300 = arith.mulf %299, %15 : vector<16x64xf32>
    %cst_175 = arith.constant 5.000000e-01 : f32
    %301 = vector.broadcast %cst_175 : f32 to vector<16x64xf32>
    %302 = arith.mulf %301, %15 : vector<16x64xf32>
    %303 = math.tanh %302 : vector<16x64xf32>
    %cst_176 = arith.constant 1.000000e+00 : f32
    %304 = vector.broadcast %cst_176 : f32 to vector<16x64xf32>
    %305 = arith.addf %304, %303 : vector<16x64xf32>
    %306 = arith.mulf %300, %305 : vector<16x64xf32>
    %307 = arith.mulf %298, %306 : vector<16x64xf32>
    %308 = arith.truncf %307 : vector<16x64xf32> to vector<16x64xbf16>
    %cst_177 = arith.constant dense<0.000000e+00> : vector<16x32xf32>
    %309 = tpu.matmul %308, %2, %cst_177 {dimension_numbers = #tpu.dot_dimension_numbers<[1], [0], [0], [1], [0, 0, 1, 1], [], []>} : vector<16x64xbf16>, vector<64x32xbf16>, vector<16x32xf32> -> vector<16x32xf32>
    %c0_178 = arith.constant 0 : index
    %c0_179 = arith.constant 0 : index
    %310 = vector.load %arg10[%c0_178, %c0_179] : memref<16x32xf32, #tpu.memory_space<vmem>>, vector<16x32xf32>
    tpu.vector_store %arg10[%c0_178, %c0_179], %309 {strides = array<i32>} : memref<16x32xf32, #tpu.memory_space<vmem>>, vector<16x32xf32>,
    return
  }
  func.func @transform_0(%arg0: i32) -> (i32, i32) {
    %c0_i32 = arith.constant 0 : i32
    %c0_i32_0 = arith.constant 0 : i32
    return %arg0, %c0_i32 : i32, i32
  }
  func.func @transform_1(%arg0: i32) -> (i32, i32) {
    %c0_i32 = arith.constant 0 : i32
    %c0_i32_0 = arith.constant 0 : i32
    %c0_i32_1 = arith.constant 0 : i32
    return %c0_i32, %c0_i32_0 : i32, i32
  }
  func.func @transform_2(%arg0: i32) -> (i32, i32) {
    %c0_i32 = arith.constant 0 : i32
    %c0_i32_0 = arith.constant 0 : i32
    %c0_i32_1 = arith.constant 0 : i32
    return %c0_i32, %c0_i32_0 : i32, i32
  }
  func.func @transform_3(%arg0: i32) -> (i32, i32) {
    %c0_i32 = arith.constant 0 : i32
    %c0_i32_0 = arith.constant 0 : i32
    %c0_i32_1 = arith.constant 0 : i32
    return %c0_i32, %c0_i32_0 : i32, i32
  }
  func.func @transform_4(%arg0: i32) -> (i32, i32) {
    %c0_i32 = arith.constant 0 : i32
    %c0_i32_0 = arith.constant 0 : i32
    %c0_i32_1 = arith.constant 0 : i32
    return %c0_i32, %c0_i32_0 : i32, i32
  }
  func.func @transform_5(%arg0: i32) -> (i32, i32) {
    %c0_i32 = arith.constant 0 : i32
    %c0_i32_0 = arith.constant 0 : i32
    %c0_i32_1 = arith.constant 0 : i32
    return %c0_i32, %c0_i32_0 : i32, i32
  }
  func.func @transform_6(%arg0: i32) -> (i32, i32) {
    %c0_i32 = arith.constant 0 : i32
    %c0_i32_0 = arith.constant 0 : i32
    %c0_i32_1 = arith.constant 0 : i32
    return %c0_i32, %c0_i32_0 : i32, i32
  }
  func.func @transform_7(%arg0: i32) -> (i32, i32) {
    %c0_i32 = arith.constant 0 : i32
    %c0_i32_0 = arith.constant 0 : i32
    %c0_i32_1 = arith.constant 0 : i32
    return %c0_i32, %c0_i32_0 : i32, i32
  }
  func.func @transform_8(%arg0: i32) -> (i32, i32) {
    %c0_i32 = arith.constant 0 : i32
    %c0_i32_0 = arith.constant 0 : i32
    %c0_i32_1 = arith.constant 0 : i32
    return %c0_i32, %c0_i32_0 : i32, i32
  }
  func.func @transform_9(%arg0: i32) -> (i32, i32) {
    %c0_i32 = arith.constant 0 : i32
    %c0_i32_0 = arith.constant 0 : i32
    return %arg0, %c0_i32 : i32, i32
  }
}

</mosaic_0001>

<llo_original>
// kernel: tpu_custom_call.1
$region0: #{tpu_custom_call.1}
  #allocation0 [shape = 'u32[]', space=smem, size = 0x4, offset = 0x4, fixed_abs, tag = 'smem constant byte address 0x4 - core index']
  #allocation1 [shape = 'u32[144,128]{1,0:T(1,128)}', space=vmem, size = 0x12000, scoped, tag = 'internal scratch']
  #allocation2 [shape = 'f32[8,2,16,64]{3,2,1,0:T(8,128)}', space=vmem, size = 0x20000, scoped, tag = 'scratch operand']
  #allocation3 [shape = 'f32[8,2,16,64]{3,2,1,0:T(8,128)}', space=vmem, size = 0x20000, scoped, tag = 'scratch operand']
  #allocation4 [shape = 'f32[8,2,16,64]{3,2,1,0:T(8,128)}', space=vmem, size = 0x20000, scoped, tag = 'scratch operand']
  #allocation5 [shape = 'f32[8,2,64]{2,1,0:T(2,128)}', space=vmem, size = 0x2000, scoped, tag = 'scratch operand']
  %s0 = inlined_call_operand.vmem [shape: f32[32,32], index: 0, kind: input, shape index: {}]
  %s1 = inlined_call_operand.vmem [shape: bf16[32,128], index: 1, kind: input, shape index: {}]
  %s2 = inlined_call_operand.vmem [shape: f32[4,64], index: 2, kind: input, shape index: {}]
  %s3 = inlined_call_operand.vmem [shape: f32[1,64], index: 3, kind: input, shape index: {}]
  %s4 = inlined_call_operand.hbm [shape: bf16[64,96], index: 4, kind: input, shape index: {}]
  %s5 = inlined_call_operand.vmem [shape: f32[1,64], index: 5, kind: input, shape index: {}]
  %s6 = inlined_call_operand.hbm [shape: f32[16,64], index: 6, kind: input, shape index: {}]
  %s7 = inlined_call_operand.vmem [shape: f32[1,64], index: 7, kind: input, shape index: {}]
  %s8 = inlined_call_operand.vmem [shape: bf16[64,32], index: 8, kind: input, shape index: {}]
  %s9 = inlined_call_operand.hbm [shape: f32[32,32], index: 9, kind: output, shape index: {}]
  %s10 = sld [smem:[#allocation0]]
  $region77: #{tpu_custom_call.1} parent=0
    _
  %s12 = ssub.s32 1, %s10
  %s13 = scalar_select 0, %s12, %s10
  $region1: #{tpu_custom_call.1} parent=0
    #allocation6 [shape = 'u8[16384]{0}', space=vmem, size = 0x4000, scoped, tag = 'input window, operand 4, single buffered']
    #allocation7 [shape = 's32[2]{0}', space=sflag, size = 0x8, scoped, tag = 'scoped memory for tpu_custom_call.1']
    #allocation8 [shape = 's32[2]{0}', space=sflag, size = 0x8, scoped, tag = 'scoped memory for tpu_custom_call.1']
    #allocation9 [shape = 'u8[8192]{0}', space=vmem, size = 0x2000, scoped, tag = 'input window, operand 6, single buffered']
    #allocation10 [shape = 's32[1]{0}', space=sflag, size = 0x4, scoped, tag = 'scoped memory for tpu_custom_call.1']
    #allocation11 [shape = 'u8[16384]{0}', space=vmem, size = 0x4000, scoped, tag = 'output window, operand 0']
    %14 = vsyncpa [#allocation7], 0
    %15 = vsyncpa [#allocation10], 0
    %16 = vsyncpa [#allocation8], 0
    %s17 = scalar_lea.sflag [#allocation8], 1
    %18 = vsyncpa %s17, 0
    loop: start=0, step=1, limit=4
    $region2: #{tpu_custom_call.1} parent=1 // loop_pre_header
      _
    $region3: #{tpu_custom_call.1} parent=1 // loop_header
      %s20 = sphi 0, %s24
      %p21 = scmp.ge.s32.totalorder %s20, 4
      %s30 = sphi 0, %s32
      %s33 = sphi 0, %s30
      %s34 = sphi 0, %s33
      %s50 = sphi 0, %s34
      %s54 = sphi 0, %s54
      %s56 = sphi 0, %s54
      %s57 = sphi 0, %s56
      %s71 = sphi 0, %s57
      %s75 = sphi 0, %s75
      %s77 = sphi 0, %s75
      %s78 = sphi 0, %s77
      %s92 = sphi 0, %s78
      %s96 = sphi 0, %s96
      %s98 = sphi 0, %s96
      %s99 = sphi 0, %s98
      %s113 = sphi 0, %s99
      %s117 = sphi 0, %s117
      %s119 = sphi 0, %s117
      %s120 = sphi 0, %s119
      %s134 = sphi 0, %s120
      %s138 = sphi 0, %s138
      %s140 = sphi 0, %s138
      %s141 = sphi 0, %s140
      %s155 = sphi 0, %s141
      %s159 = sphi 0, %s159
      %s161 = sphi 0, %s159
      %s162 = sphi 0, %s161
      %s176 = sphi 0, %s162
      %s180 = sphi 0, %s180
      %s182 = sphi 0, %s180
      %s183 = sphi 0, %s182
      %s197 = sphi 0, %s183
      %s201 = sphi 0, %s201
      %s203 = sphi 0, %s201
      %s204 = sphi 0, %s203
      %s218 = sphi 0, %s204
      %s224 = sphi 0, %s226
      %s227 = sphi 0, %s224
      %s228 = sphi 0, %s227
      %s244 = sphi 0, %s228
    $region4: #{tpu_custom_call.1} parent=1 // loop_header_branch
      %23 = sbr.rel (%p21) target = $region8
    $region5: #{tpu_custom_call.1} parent=1 // loop_body
      %s25 = ssub.s32 %s20, 1
      %s26 = ssub.s32 %s20, 2
      %s27 = sadd.s32 %s20, 1
      %s28 = ssub.s32 %s20, %s27
      %p29 = scmp.eq.s32.totalorder %s28, 0
      %s31 = sadd.s32 %s30, 1
      %s32 = scalar_select %p29, %s30, %s31
      %p35 = pneg %p29
      %p36 = scmp.eq.s32.totalorder %s20, 1
      %p37 = por %p35, %p36
      %p38 = scmp.ne.s32.totalorder %s30, %s33
      %p39 = scmp.eq.s32.totalorder %s20, 0
      %p40 = por %p38, %p39
      %p41 = scmp.ne.s32.totalorder %s30, %s33
      %p42 = scmp.eq.s32.totalorder %s25, 1
      %p43 = por %p41, %p42
      %p44 = scmp.ne.s32.totalorder %s33, %s34
      %p45 = scmp.eq.s32.totalorder %s25, 0
      %p46 = por %p44, %p45
      %p47 = scmp.ne.s32.totalorder %s33, %s34
      %p48 = scmp.eq.s32.totalorder %s26, 1
      %p49 = por %p47, %p48
      %p51 = scmp.ne.s32.totalorder %s34, %s50
      %p52 = scmp.eq.s32.totalorder %s26, 0
      %p53 = por %p51, %p52
      %s55 = sadd.s32 %s54, 1
      %p58 = scmp.eq.s32.totalorder %s20, 1
      %p59 = scmp.ne.s32.totalorder %s54, %s56
      %p60 = scmp.eq.s32.totalorder %s20, 0
      %p61 = por %p59, %p60
      %p62 = scmp.ne.s32.totalorder %s54, %s56
      %p63 = scmp.eq.s32.totalorder %s25, 1
      %p64 = por %p62, %p63
      %p65 = scmp.ne.s32.totalorder %s56, %s57
      %p66 = scmp.eq.s32.totalorder %s25, 0
      %p67 = por %p65, %p66
      %p68 = scmp.ne.s32.totalorder %s56, %s57
      %p69 = scmp.eq.s32.totalorder %s26, 1
      %p70 = por %p68, %p69
      %p72 = scmp.ne.s32.totalorder %s57, %s71
      %p73 = scmp.eq.s32.totalorder %s26, 0
      %p74 = por %p72, %p73
      %s76 = sadd.s32 %s75, 1
      %p79 = scmp.eq.s32.totalorder %s20, 1
      %p80 = scmp.ne.s32.totalorder %s75, %s77
      %p81 = scmp.eq.s32.totalorder %s20, 0
      %p82 = por %p80, %p81
      %p83 = scmp.ne.s32.totalorder %s75, %s77
      %p84 = scmp.eq.s32.totalorder %s25, 1
      %p85 = por %p83, %p84
      %p86 = scmp.ne.s32.totalorder %s77, %s78
      %p87 = scmp.eq.s32.totalorder %s25, 0
      %p88 = por %p86, %p87
      %p89 = scmp.ne.s32.totalorder %s77, %s78
      %p90 = scmp.eq.s32.totalorder %s26, 1
      %p91 = por %p89, %p90
      %p93 = scmp.ne.s32.totalorder %s78, %s92
      %p94 = scmp.eq.s32.totalorder %s26, 0
      %p95 = por %p93, %p94
      %s97 = sadd.s32 %s96, 1
      %p100 = scmp.eq.s32.totalorder %s20, 1
      %p101 = scmp.ne.s32.totalorder %s96, %s98
      %p102 = scmp.eq.s32.totalorder %s20, 0
      %p103 = por %p101, %p102
      %p104 = scmp.ne.s32.totalorder %s96, %s98
      %p105 = scmp.eq.s32.totalorder %s25, 1
      %p106 = por %p104, %p105
      %p107 = scmp.ne.s32.totalorder %s98, %s99
      %p108 = scmp.eq.s32.totalorder %s25, 0
      %p109 = por %p107, %p108
      %p110 = scmp.ne.s32.totalorder %s98, %s99
      %p111 = scmp.eq.s32.totalorder %s26, 1
      %p112 = por %p110, %p111
      %p114 = scmp.ne.s32.totalorder %s99, %s113
      %p115 = scmp.eq.s32.totalorder %s26, 0
      %p116 = por %p114, %p115
      %s118 = sadd.s32 %s117, 1
      %p121 = scmp.eq.s32.totalorder %s20, 1
      %p122 = scmp.ne.s32.totalorder %s117, %s119
      %p123 = scmp.eq.s32.totalorder %s20, 0
      %p124 = por %p122, %p123
      %p125 = scmp.ne.s32.totalorder %s117, %s119
      %p126 = scmp.eq.s32.totalorder %s25, 1
      %p127 = por %p125, %p126
      %p128 = scmp.ne.s32.totalorder %s119, %s120
      %p129 = scmp.eq.s32.totalorder %s25, 0
      %p130 = por %p128, %p129
      %p131 = scmp.ne.s32.totalorder %s119, %s120
      %p132 = scmp.eq.s32.totalorder %s26, 1
      %p133 = por %p131, %p132
      %p135 = scmp.ne.s32.totalorder %s120, %s134
      %p136 = scmp.eq.s32.totalorder %s26, 0
      %p137 = por %p135, %p136
      %s139 = sadd.s32 %s138, 1
      %p142 = scmp.eq.s32.totalorder %s20, 1
      %p143 = scmp.ne.s32.totalorder %s138, %s140
      %p144 = scmp.eq.s32.totalorder %s20, 0
      %p145 = por %p143, %p144
      %p146 = scmp.ne.s32.totalorder %s138, %s140
      %p147 = scmp.eq.s32.totalorder %s25, 1
      %p148 = por %p146, %p147
      %p149 = scmp.ne.s32.totalorder %s140, %s141
      %p150 = scmp.eq.s32.totalorder %s25, 0
      %p151 = por %p149, %p150
      %p152 = scmp.ne.s32.totalorder %s140, %s141
      %p153 = scmp.eq.s32.totalorder %s26, 1
      %p154 = por %p152, %p153
      %p156 = scmp.ne.s32.totalorder %s141, %s155
      %p157 = scmp.eq.s32.totalorder %s26, 0
      %p158 = por %p156, %p157
      %s160 = sadd.s32 %s159, 1
      %p163 = scmp.eq.s32.totalorder %s20, 1
      %p164 = scmp.ne.s32.totalorder %s159, %s161
      %p165 = scmp.eq.s32.totalorder %s20, 0
      %p166 = por %p164, %p165
      %p167 = scmp.ne.s32.totalorder %s159, %s161
      %p168 = scmp.eq.s32.totalorder %s25, 1
      %p169 = por %p167, %p168
      %p170 = scmp.ne.s32.totalorder %s161, %s162
      %p171 = scmp.eq.s32.totalorder %s25, 0
      %p172 = por %p170, %p171
      %p173 = scmp.ne.s32.totalorder %s161, %s162
      %p174 = scmp.eq.s32.totalorder %s26, 1
      %p175 = por %p173, %p174
      %p177 = scmp.ne.s32.totalorder %s162, %s176
      %p178 = scmp.eq.s32.totalorder %s26, 0
      %p179 = por %p177, %p178
      %s181 = sadd.s32 %s180, 1
      %p184 = scmp.eq.s32.totalorder %s20, 1
      %p185 = scmp.ne.s32.totalorder %s180, %s182
      %p186 = scmp.eq.s32.totalorder %s20, 0
      %p187 = por %p185, %p186
      %p188 = scmp.ne.s32.totalorder %s180, %s182
      %p189 = scmp.eq.s32.totalorder %s25, 1
      %p190 = por %p188, %p189
      %p191 = scmp.ne.s32.totalorder %s182, %s183
      %p192 = scmp.eq.s32.totalorder %s25, 0
      %p193 = por %p191, %p192
      %p194 = scmp.ne.s32.totalorder %s182, %s183
      %p195 = scmp.eq.s32.totalorder %s26, 1
      %p196 = por %p194, %p195
      %p198 = scmp.ne.s32.totalorder %s183, %s197
      %p199 = scmp.eq.s32.totalorder %s26, 0
      %p200 = por %p198, %p199
      %s202 = sadd.s32 %s201, 1
      %p205 = scmp.eq.s32.totalorder %s20, 1
      %p206 = scmp.ne.s32.totalorder %s201, %s203
      %p207 = scmp.eq.s32.totalorder %s20, 0
      %p208 = por %p206, %p207
      %p209 = scmp.ne.s32.totalorder %s201, %s203
      %p210 = scmp.eq.s32.totalorder %s25, 1
      %p211 = por %p209, %p210
      %p212 = scmp.ne.s32.totalorder %s203, %s204
      %p213 = scmp.eq.s32.totalorder %s25, 0
      %p214 = por %p212, %p213
      %p215 = scmp.ne.s32.totalorder %s203, %s204
      %p216 = scmp.eq.s32.totalorder %s26, 1
      %p217 = por %p215, %p216
      %p219 = scmp.ne.s32.totalorder %s204, %s218
      %p220 = scmp.eq.s32.totalorder %s26, 0
      %p221 = por %p219, %p220
      %s222 = ssub.s32 %s20, %s27
      %p223 = scmp.eq.s32.totalorder %s222, 0
      %s225 = sadd.s32 %s224, 1
      %s226 = scalar_select %p223, %s224, %s225
      %p229 = pneg %p223
      %p230 = scmp.eq.s32.totalorder %s20, 1
      %p231 = por %p229, %p230
      %p232 = scmp.ne.s32.totalorder %s224, %s227
      %p233 = scmp.eq.s32.totalorder %s20, 0
      %p234 = por %p232, %p233
      %p235 = scmp.ne.s32.totalorder %s224, %s227
      %p236 = scmp.eq.s32.totalorder %s25, 1
      %p237 = por %p235, %p236
      %p238 = scmp.ne.s32.totalorder %s227, %s228
      %p239 = scmp.eq.s32.totalorder %s25, 0
      %p240 = por %p238, %p239
      %p241 = scmp.ne.s32.totalorder %s227, %s228
      %p242 = scmp.eq.s32.totalorder %s26, 1
      %p243 = por %p241, %p242
      %p245 = scmp.ne.s32.totalorder %s228, %s244
      %p246 = scmp.eq.s32.totalorder %s26, 0
      %p247 = por %p245, %p246
      %p248 = scmp.le.s32.totalorder 1, %s20
      %p249 = scmp.lt.s32.totalorder %s20, 3
      %p250 = pnand %p248, %p249
      %p251 = pneg %p250
      // Predicated region
      $region9: #{tpu_custom_call.1} parent=5 // pred_check
        _
      $region10: #{tpu_custom_call.1} parent=5 // pred_check_branch
        %253 = sbr.rel (%p250) target = $region12
      $region11: #{tpu_custom_call.1} parent=5 // pred_region
        %s254 = ssub.s32 %s20, 1
        // Predicated region
        $region13: #{tpu_custom_call.1} parent=11 // pred_check
          %p255 = pneg %p67
        $region14: #{tpu_custom_call.1} parent=11 // pred_check_branch
          %257 = sbr.rel (%p255) target = $region16
        $region15: #{tpu_custom_call.1} parent=11 // pred_region
          _
        $region16: #{tpu_custom_call.1} parent=11 // pred_fallthru
          _
        // Predicated region
        $region17: #{tpu_custom_call.1} parent=11 // pred_check
          %p258 = pneg %p88
        $region18: #{tpu_custom_call.1} parent=11 // pred_check_branch
          %260 = sbr.rel (%p258) target = $region20
        $region19: #{tpu_custom_call.1} parent=11 // pred_region
          _
        $region20: #{tpu_custom_call.1} parent=11 // pred_fallthru
          _
        // Predicated region
        $region21: #{tpu_custom_call.1} parent=11 // pred_check
          %p261 = pneg %p109
        $region22: #{tpu_custom_call.1} parent=11 // pred_check_branch
          %263 = sbr.rel (%p261) target = $region24
        $region23: #{tpu_custom_call.1} parent=11 // pred_region
          _
        $region24: #{tpu_custom_call.1} parent=11 // pred_fallthru
          _
        // Predicated region
        $region25: #{tpu_custom_call.1} parent=11 // pred_check
          %p264 = pneg %p130
        $region26: #{tpu_custom_call.1} parent=11 // pred_check_branch
          %266 = sbr.rel (%p264) target = $region28
        $region27: #{tpu_custom_call.1} parent=11 // pred_region
          %s268 = ssub.s32 512, 512
          %269 = vsyncadd [#allocation7], %s268
          %s270 = sshll.u32 [#allocation6], 4
          %s271 = int_to_ptr.vmem [resolvable:$true] %s270
          %276 = dma.hbm_to_vmem [thread:$0]  %s4, 512, %s271, [#allocation7], 64, 64, 4
        $region28: #{tpu_custom_call.1} parent=11 // pred_fallthru
          _
        // Predicated region
        $region29: #{tpu_custom_call.1} parent=11 // pred_check
          %p277 = pneg %p151
        $region30: #{tpu_custom_call.1} parent=11 // pred_check_branch
          %279 = sbr.rel (%p277) target = $region32
        $region31: #{tpu_custom_call.1} parent=11 // pred_region
          _
        $region32: #{tpu_custom_call.1} parent=11 // pred_fallthru
          _
        // Predicated region
        $region33: #{tpu_custom_call.1} parent=11 // pred_check
          %p280 = pneg %p172
        $region34: #{tpu_custom_call.1} parent=11 // pred_check_branch
          %282 = sbr.rel (%p280) target = $region36
        $region35: #{tpu_custom_call.1} parent=11 // pred_region
          %s284 = ssub.s32 256, 256
          %285 = vsyncadd [#allocation10], %s284
          %s286 = sshll.u32 [#allocation9], 4
          %s287 = int_to_ptr.vmem [resolvable:$true] %s286
          %292 = dma.hbm_to_vmem [thread:$0]  %s6, 256, %s287, [#allocation10], 128, 128, 8
        $region36: #{tpu_custom_call.1} parent=11 // pred_fallthru
          _
        // Predicated region
        $region37: #{tpu_custom_call.1} parent=11 // pred_check
          %p293 = pneg %p193
        $region38: #{tpu_custom_call.1} parent=11 // pred_check_branch
          %295 = sbr.rel (%p293) target = $region40
        $region39: #{tpu_custom_call.1} parent=11 // pred_region
          _
        $region40: #{tpu_custom_call.1} parent=11 // pred_fallthru
          _
        // Predicated region
        $region41: #{tpu_custom_call.1} parent=11 // pred_check
          %p296 = pneg %p214
        $region42: #{tpu_custom_call.1} parent=11 // pred_check_branch
          %298 = sbr.rel (%p296) target = $region44
        $region43: #{tpu_custom_call.1} parent=11 // pred_region
          _
        $region44: #{tpu_custom_call.1} parent=11 // pred_fallthru
          _
      $region12: #{tpu_custom_call.1} parent=5 // pred_fallthru
        _
      %p299 = scmp.lt.s32.totalorder %s20, 2
      // Predicated region
      $region45: #{tpu_custom_call.1} parent=5 // pred_check
        %p300 = pneg %p299
      $region46: #{tpu_custom_call.1} parent=5 // pred_check_branch
        %302 = sbr.rel (%p300) target = $region48
      $region47: #{tpu_custom_call.1} parent=5 // pred_region
        // Predicated region
        $region49: #{tpu_custom_call.1} parent=47 // pred_check
          %p303 = pneg %p40
        $region50: #{tpu_custom_call.1} parent=47 // pred_check_branch
          %305 = sbr.rel (%p303) target = $region52
        $region51: #{tpu_custom_call.1} parent=47 // pred_region
          %s306 = smul.u32 2, %s20
          %p307 = scmp.lt.s32.totalorder %s306, 3
          %s308 = scalar_select %p307, %s306, 3
          %s309 = smul.addr %s308, 8
          %s310 = scalar_lea.vmem %s0, %s309
          %s311 = smul.u32 2, %s20
        $region52: #{tpu_custom_call.1} parent=47 // pred_fallthru
          _
      $region48: #{tpu_custom_call.1} parent=5 // pred_fallthru
        _
      %p312 = scmp.le.s32.totalorder 1, %s20
      %p313 = scmp.lt.s32.totalorder %s20, 3
      %p314 = pnand %p312, %p313
      %p315 = pneg %p314
      // Predicated region
      $region53: #{tpu_custom_call.1} parent=5 // pred_check
        _
      $region54: #{tpu_custom_call.1} parent=5 // pred_check_branch
        %317 = sbr.rel (%p314) target = $region56
      $region55: #{tpu_custom_call.1} parent=5 // pred_region
        %s318 = ssub.s32 %s20, 1
        // Predicated region
        $region57: #{tpu_custom_call.1} parent=55 // pred_check
          %p319 = pneg %p130
        $region58: #{tpu_custom_call.1} parent=55 // pred_check_branch
          %321 = sbr.rel (%p319) target = $region60
        $region59: #{tpu_custom_call.1} parent=55 // pred_region
          %322 = dma.done [#allocation7], 512
        $region60: #{tpu_custom_call.1} parent=55 // pred_fallthru
          _
        // Predicated region
        $region61: #{tpu_custom_call.1} parent=55 // pred_check
          %p323 = pneg %p172
        $region62: #{tpu_custom_call.1} parent=55 // pred_check_branch
          %325 = sbr.rel (%p323) target = $region64
        $region63: #{tpu_custom_call.1} parent=55 // pred_region
          %326 = dma.done [#allocation10], 256
        $region64: #{tpu_custom_call.1} parent=55 // pred_fallthru
          _
        %s327 = smul.u32 2, %s25
        %p328 = scmp.lt.s32.totalorder %s327, 3
        %s329 = scalar_select %p328, %s327, 3
        %s330 = smul.addr %s329, 8
        %s331 = scalar_lea.vmem %s0, %s330
        %p332 = pneg %p46
        %p333 = pneg %p43
        %p334 = pneg %p67
        %p335 = pneg %p64
        %p336 = pneg %p88
        %p337 = pneg %p85
        %p338 = pneg %p109
        %p339 = pneg %p106
        %p340 = pneg %p130
        %p341 = pneg %p127
        %p342 = pneg %p151
        %p343 = pneg %p148
        %p344 = pneg %p172
        %p345 = pneg %p169
        %p346 = pneg %p193
        %p347 = pneg %p190
        %p348 = pneg %p214
        %p349 = pneg %p211
        %p350 = pneg %p240
        %p351 = pneg %p237
        %s352 = sand.u32 %s227, 1
        %s353 = scalar_lea.sflag [#allocation8], %s352
        %s354 = sand.u32 %s227, 1
        %s355 = smul.addr %s354, 16
        %s356 = scalar_lea.vmem [#allocation11], %s355
        %s357 = smul.u32 2, %s25
        %p358 = scmp.lt.s32.totalorder %s357, 3
        %s359 = scalar_select %p358, %s357, 3
        %s360 = smul.addr %s359, 8
        %s361 = scalar_lea.vmem %s0, %s360
        %s362 = smul.u32 2, %s25
        %s363 = smul.u32 2, %s25
        %v365 = vld [vmem:[%s1] sm:$0xf]
        %v366 = vld [vmem:[%s1 + $0x4] sm:$0xf]
        %v367 = vld [vmem:[%s1 + $0x8] sm:$0xf]
        %v368 = vld [vmem:[%s1 + $0xc] sm:$0xf]
        %v369 = vld [vmem:[#allocation6] sm:$0xf]
        %v370 = vld [vmem:[#allocation6 + $0x4] sm:$0xf]
        %v371 = vld [vmem:[#allocation6 + $0x8] sm:$0xf]
        %v372 = vld [vmem:[#allocation6 + $0xc] sm:$0xf]
        %v373 = vld [vmem:[#allocation6 + $0x10] sm:$0xf]
        %v374 = vld [vmem:[#allocation6 + $0x14] sm:$0xf]
        %v375 = vld [vmem:[#allocation6 + $0x18] sm:$0xf]
        %v376 = vld [vmem:[#allocation6 + $0x1c] sm:$0xf]
        %v377 = vld [vmem:[%s8] sm:$0xf]
        %v378 = vld [vmem:[%s8 + $0x4] sm:$0xf]
        %v379 = vld [vmem:[%s8 + $0x8] sm:$0xf]
        %v380 = vld [vmem:[%s8 + $0xc] sm:$0xf]
        %v381 = vld [vmem:[%s8 + $0x10] sm:$0xf]
        %v382 = vld [vmem:[%s8 + $0x14] sm:$0xf]
        %v383 = vld [vmem:[%s8 + $0x18] sm:$0xf]
        %v384 = vld [vmem:[%s8 + $0x1c] sm:$0xf]
        %v385 = vld [vmem:[%s2] sm:$0xf]
        %v386 = vld [vmem:[%s3] sm:$0x1]
        %v387 = vld [vmem:[%s5] sm:$0x1]
        %v388 = vld [vmem:[#allocation9] sm:$0xff]
        %v389 = vld [vmem:[#allocation9 + $0x8] sm:$0xff]
        %v390 = vmul.f32 %v388, 1.442695
        %v391 = vpow.pop %v390
        %v392 = vmul.f32 %v389, 1.442695
        %v393 = vpow.pop %v392
        %v394 = vsub.f32 0.0, %v391
        %v395 = vsub.f32 0.0, %v393
        %v396 = vld [vmem:[%s7] sm:$0x1]
        %v397 = vld [vmem:[%s361] sm:$0xff]
        %v398 = vld [vmem:[%s361 + $0x8] sm:$0xff]
        %v399 = vpack.c.bf16 %v398, %v397
        %v404 = vunpack.c.l.b16 %v365
        %v405 = vunpack.c.l.b16 %v366
        %v406 = vunpack.c.l.b16 %v367
        %v407 = vunpack.c.l.b16 %v368
        %v408 = vpack.c.b16 %v405, %v404
        %v409 = vpack.c.b16 %v407, %v406
        %vm412 = vcmask 261120
        %v414 = vsel %vm412, %v399, 0
        %416 = vmatprep.subr.bf16.mxu0 0
        %417 = vmatpush1.bf16.msra.mxu0 %v408
        %418 = vmatprep.subr.bf16.mxu0 0
        %419 = vmatpush1.bf16.msra.mxu0 %v409
        %420 = vmatprep.subr.bf16.mxu0 0
        %421 = vmatpush1.bf16.msra.mxu0 0
        %422 = vmatprep.subr.bf16.mxu0 0
        %423 = vmatpush1.bf16.msra.mxu0 0
        %424 = vmatprep.subr.bf16.mxu0 0
        %425 = vmatpush1.bf16.msra.mxu0 0
        %426 = vmatprep.subr.bf16.mxu0 0
        %427 = vmatpush1.bf16.msra.mxu0 0
        %428 = vmatprep.subr.bf16.mxu0 0
        %429 = vmatpush1.bf16.msra.mxu0 0
        %430 = vmatprep.subr.bf16.mxu0 0
        %431 = vmatpush1.bf16.msra.mxu0 0
        %432 = vmatprep.subr.bf16.mxu0 0
        %433 = vmatpush1.bf16.msra.mxu0 0
        %434 = vmatprep.subr.bf16.mxu0 0
        %435 = vmatpush1.bf16.msra.mxu0 0
        %436 = vmatprep.subr.bf16.mxu0 0
        %437 = vmatpush1.bf16.msra.mxu0 0
        %438 = vmatprep.subr.bf16.mxu0 0
        %439 = vmatpush1.bf16.msra.mxu0 0
        %440 = vmatprep.subr.bf16.mxu0 0
        %441 = vmatpush1.bf16.msra.mxu0 0
        %442 = vmatprep.subr.bf16.mxu0 0
        %443 = vmatpush1.bf16.msra.mxu0 0
        %444 = vmatprep.subr.bf16.mxu0 0
        %445 = vmatpush1.bf16.msra.mxu0 0
        %446 = vmatprep.subr.bf16.mxu0 0
        %447 = vmatpush1.bf16.msra.mxu0 0
        %448 = vmatprep.mubr.bf16.mxu0 0
        %449 = vmatmul.mubr.bf16.gmra.mrb[0].mxu0 %v414
        %v450 = vpop.f32.mrb[0].mxu0
        %v451 = vadd.f32 0.0, %v450
        %v452 = vpop.f32.mrb[0].mxu0
        %v453 = vpop.f32.mrb[0].mxu0
        %v454 = vadd.f32 0.0, %v453
        %v455 = vpop.f32.mrb[0].mxu0
        %456 = vdwg.mxu0
        %v457 = vlaneseq
        %v458 = vshrl.u32 %v457, 7
        %v459 = vadd.s32 %v458, 8
        %vm460 = vcmp.lt.s32.totalorder %v458, 0
        %v461 = vsub.s32 0, %v458
        %v462 = vsel %vm460, %v461, %v458
        %v463 = vshrl.u32 %v462, 3
        %v464 = vand.u32 %v462, 7
        %v465 = vsub.s32 0, %v464
        %v466 = vsel %vm460, %v465, %v464
        %vm467 = vcmp.lt.s32.totalorder %v459, 0
        %v468 = vsub.s32 0, %v459
        %v469 = vsel %vm467, %v468, %v459
        %v470 = vshrl.u32 %v469, 3
        %v471 = vand.u32 %v469, 7
        %v472 = vsub.s32 0, %v471
        %v473 = vsel %vm467, %v472, %v471
        %vm474 = vcmp.ne.s32.totalorder %v466, 0
        %vm475 = vcmp.ne.s32.totalorder %v473, 0
        %vm476 = vcmp.lt.s32.totalorder %v466, 0
        %vm477 = vcmp.lt.s32.totalorder %v473, 0
        %vm478 = vmand %vm476, %vm474
        %vm479 = vmand %vm477, %vm475
        %v480 = vadd.s32 %v466, 8
        %v481 = vadd.s32 %v473, 8
        %v482 = vsel %vm478, %v480, %v466
        %v483 = vsel %vm479, %v481, %v473
        %v485 = vlaneseq
        %v486 = vshrl.u32 %v485, 7
        %v487 = vsub.s32 0, %v486
        %v488 = vrot.slane %v386, %v487
        %vm490 = vcmp.lt.s32.totalorder %v482, 3
        %vm491 = vcmp.lt.s32.totalorder %v483, 3
        %v492 = vrot.slane %v451, 5
        %v493 = vrot.slane %v454, 5
        %vm494 = vcmp.lt.s32.totalorder %v458, 3
        %v495 = vsel %vm494, %v492, %v493
        %v496 = vsel %vm494, %v493, %v492
        %v497 = vsel %vm490, 0.0, %v496
        %v498 = vsel %vm491, 0.0, %v495
        %v499 = vlaneseq
        %v500 = vshrl.u32 %v499, 7
        %v501 = vsub.s32 0, %v500
        %v502 = vrot.slane %v385, %v501
        %v503 = vmul.f32 %v497, %v502
        %v504 = vmul.f32 %v498, %v502
        %v505 = vadd.f32 %v488, %v503
        %v506 = vadd.f32 %v488, %v504
        %vm507 = vcmp.lt.s32.totalorder %v482, 2
        %vm508 = vcmp.lt.s32.totalorder %v483, 2
        %v509 = vrot.slane %v451, 6
        %v510 = vrot.slane %v454, 6
        %vm511 = vcmp.lt.s32.totalorder %v458, 2
        %v512 = vsel %vm511, %v509, %v510
        %v513 = vsel %vm511, %v510, %v509
        %v514 = vsel %vm507, 0.0, %v513
        %v515 = vsel %vm508, 0.0, %v512
        %v516 = vlaneseq
        %v517 = vshrl.u32 %v516, 7
        %v518 = vsub.s32 1, %v517
        %v519 = vrot.slane %v385, %v518
        %v520 = vmul.f32 %v514, %v519
        %v521 = vmul.f32 %v515, %v519
        %v522 = vadd.f32 %v505, %v520
        %v523 = vadd.f32 %v506, %v521
        %vm524 = vcmp.lt.s32.totalorder %v482, 1
        %vm525 = vcmp.lt.s32.totalorder %v483, 1
        %v526 = vrot.slane %v451, 7
        %v527 = vrot.slane %v454, 7
        %vm528 = vcmp.lt.s32.totalorder %v458, 1
        %v529 = vsel %vm528, %v526, %v527
        %v530 = vsel %vm528, %v527, %v526
        %v531 = vsel %vm524, 0.0, %v530
        %v532 = vsel %vm525, 0.0, %v529
        %v533 = vlaneseq
        %v534 = vshrl.u32 %v533, 7
        %v535 = vsub.s32 2, %v534
        %v536 = vrot.slane %v385, %v535
        %v537 = vmul.f32 %v531, %v536
        %v538 = vmul.f32 %v532, %v536
        %v539 = vadd.f32 %v522, %v537
        %v540 = vadd.f32 %v523, %v538
        %v541 = vlaneseq
        %v542 = vshrl.u32 %v541, 7
        %v543 = vsub.s32 3, %v542
        %v544 = vrot.slane %v385, %v543
        %v545 = vmul.f32 %v451, %v544
        %v546 = vmul.f32 %v454, %v544
        %v547 = vadd.f32 %v539, %v545
        %v548 = vadd.f32 %v540, %v546
        %v549 = vmul.f32 %v547, 0.5
        %v550 = vmul.f32 %v548, 0.5
        %v551 = vtanh.pop %v549
        %v552 = vtanh.pop %v550
        %v553 = vadd.f32 %v551, 1.0
        %v554 = vadd.f32 %v552, 1.0
        %v555 = vmul.f32 %v549, %v553
        %v556 = vmul.f32 %v550, %v554
        %v557 = vpack.c.bf16 %v556, %v555
        %v566 = vunpack.c.l.b16 %v369
        %v567 = vunpack.c.l.b16 %v370
        %v568 = vunpack.c.l.b16 %v371
        %v569 = vunpack.c.l.b16 %v372
        %v570 = vunpack.c.l.b16 %v373
        %v571 = vunpack.c.l.b16 %v374
        %v572 = vunpack.c.l.b16 %v375
        %v573 = vunpack.c.l.b16 %v376
        %v574 = vpack.c.b16 %v567, %v566
        %v575 = vpack.c.b16 %v569, %v568
        %v576 = vpack.c.b16 %v571, %v570
        %v577 = vpack.c.b16 %v573, %v572
        %vm582 = vcmask 523264
        %v584 = vsel %vm582, %v557, 0
        %586 = vmatprep.subr.bf16.mxu0 0
        %587 = vmatpush1.bf16.msra.mxu0 %v574
        %588 = vmatprep.subr.bf16.mxu0 0
        %589 = vmatpush1.bf16.msra.mxu0 %v575
        %590 = vmatprep.subr.bf16.mxu0 0
        %591 = vmatpush1.bf16.msra.mxu0 %v576
        %592 = vmatprep.subr.bf16.mxu0 0
        %593 = vmatpush1.bf16.msra.mxu0 %v577
        %594 = vmatprep.subr.bf16.mxu0 0
        %595 = vmatpush1.bf16.msra.mxu0 0
        %596 = vmatprep.subr.bf16.mxu0 0
        %597 = vmatpush1.bf16.msra.mxu0 0
        %598 = vmatprep.subr.bf16.mxu0 0
        %599 = vmatpush1.bf16.msra.mxu0 0
        %600 = vmatprep.subr.bf16.mxu0 0
        %601 = vmatpush1.bf16.msra.mxu0 0
        %602 = vmatprep.subr.bf16.mxu0 0
        %603 = vmatpush1.bf16.msra.mxu0 0
        %604 = vmatprep.subr.bf16.mxu0 0
        %605 = vmatpush1.bf16.msra.mxu0 0
        %606 = vmatprep.subr.bf16.mxu0 0
        %607 = vmatpush1.bf16.msra.mxu0 0
        %608 = vmatprep.subr.bf16.mxu0 0
        %609 = vmatpush1.bf16.msra.mxu0 0
        %610 = vmatprep.subr.bf16.mxu0 0
        %611 = vmatpush1.bf16.msra.mxu0 0
        %612 = vmatprep.subr.bf16.mxu0 0
        %613 = vmatpush1.bf16.msra.mxu0 0
        %614 = vmatprep.subr.bf16.mxu0 0
        %615 = vmatpush1.bf16.msra.mxu0 0
        %616 = vmatprep.subr.bf16.mxu0 0
        %617 = vmatpush1.bf16.msra.mxu0 0
        %618 = vmatprep.mubr.bf16.mxu0 0
        %619 = vmatmul.mubr.bf16.gmra.mrb[0].mxu0 %v584
        %v620 = vpop.f32.mrb[0].mxu0
        %v621 = vadd.f32 0.0, %v620
        %v622 = vpop.f32.mrb[0].mxu0
        %v623 = vpop.f32.mrb[0].mxu0
        %v624 = vadd.f32 0.0, %v623
        %v625 = vpop.f32.mrb[0].mxu0
        %626 = vdwg.mxu0
        %v628 = vlaneseq
        %v629 = vshrl.u32 %v628, 7
        %v630 = vsub.s32 0, %v629
        %v631 = vrot.slane %v387, %v630
        %v633 = vadd.f32 %v621, %v631
        %v634 = vadd.f32 %v624, %v631
        %vm635 = vcmp.gt.f32.partialorder %v633, 20.0
        %vm636 = vcmp.gt.f32.partialorder %v634, 20.0
        %v637 = vmin.f32 %v633, 20.0
        %v638 = vmin.f32 %v634, 20.0
        %v639 = vmul.f32 %v637, 1.442695
        %v640 = vpow.pop %v639
        %v641 = vmul.f32 %v638, 1.442695
        %v642 = vpow.pop %v641
        %v643 = vadd.f32 %v640, 1.0
        %v644 = vlog2.pop %v643
        %v645 = vmul.f32 %v644, 0.6931472
        %v646 = vmul.f32 -0.5, %v640
        %v647 = vadd.f32 %v646, 1.0
        %v648 = vmul.f32 %v647, %v640
        %v649 = vand.u32 2147483647, %v640
        %vm650 = vcmp.lt.f32.partialorder %v649, 0.0004427343
        %v651 = vsel %vm650, %v648, %v645
        %v652 = vadd.f32 %v642, 1.0
        %v653 = vlog2.pop %v652
        %v654 = vmul.f32 %v653, 0.6931472
        %v655 = vmul.f32 -0.5, %v642
        %v656 = vadd.f32 %v655, 1.0
        %v657 = vmul.f32 %v656, %v642
        %v658 = vand.u32 2147483647, %v642
        %vm659 = vcmp.lt.f32.partialorder %v658, 0.0004427343
        %v660 = vsel %vm659, %v657, %v654
        %v661 = vsel %vm635, %v633, %v651
        %v662 = vsel %vm636, %v634, %v660
        %v663 = vsel %vm582, %v661, 0.0
        %664 = vadd.xlane.f32.xlu0 %v663
        %v665 = vpop.xlane.xlu0 %664
        %v666 = vsel %vm582, %v662, 0.0
        %667 = vadd.xlane.f32.xlu0 %v666
        %v668 = vpop.xlane.xlu0 %667
        %v669 = vmul.f32 %v665, %v555
        %v670 = vmul.f32 %v668, %v556
        %v672 = vlaneseq
        %v673 = vshrl.u32 %v672, 7
        %v674 = vsub.s32 0, %v673
        %v675 = vrot.slane %v665, %v674
        %v676 = vlaneseq
        %v677 = vshrl.u32 %v676, 7
        %v678 = vsub.s32 1, %v677
        %v679 = vrot.slane %v665, %v678
        %v680 = vlaneseq
        %v681 = vshrl.u32 %v680, 7
        %v682 = vsub.s32 2, %v681
        %v683 = vrot.slane %v665, %v682
        %v684 = vlaneseq
        %v685 = vshrl.u32 %v684, 7
        %v686 = vsub.s32 3, %v685
        %v687 = vrot.slane %v665, %v686
        %v688 = vlaneseq
        %v689 = vshrl.u32 %v688, 7
        %v690 = vsub.s32 4, %v689
        %v691 = vrot.slane %v665, %v690
        %v692 = vlaneseq
        %v693 = vshrl.u32 %v692, 7
        %v694 = vsub.s32 5, %v693
        %v695 = vrot.slane %v665, %v694
        %v696 = vlaneseq
        %v697 = vshrl.u32 %v696, 7
        %v698 = vsub.s32 6, %v697
        %v699 = vrot.slane %v665, %v698
        %v700 = vlaneseq
        %v701 = vshrl.u32 %v700, 7
        %v702 = vsub.s32 7, %v701
        %v703 = vrot.slane %v665, %v702
        %v712 = vmul.f32 %v675, %v394
        %v713 = vmul.f32 %v675, %v395
        %v714 = vmul.f32 %v679, %v394
        %v715 = vmul.f32 %v679, %v395
        %v716 = vmul.f32 %v683, %v394
        %v717 = vmul.f32 %v683, %v395
        %v718 = vmul.f32 %v687, %v394
        %v719 = vmul.f32 %v687, %v395
        %v720 = vmul.f32 %v691, %v394
        %v721 = vmul.f32 %v691, %v395
        %v722 = vmul.f32 %v695, %v394
        %v723 = vmul.f32 %v695, %v395
        %v724 = vmul.f32 %v699, %v394
        %v725 = vmul.f32 %v699, %v395
        %v726 = vmul.f32 %v703, %v394
        %v727 = vmul.f32 %v703, %v395
        %v728 = vmul.f32 %v712, 1.442695
        %v729 = vpow.pop %v728
        %v730 = vmul.f32 %v713, 1.442695
        %v731 = vpow.pop %v730
        %v732 = vmul.f32 %v714, 1.442695
        %v733 = vpow.pop %v732
        %v734 = vmul.f32 %v715, 1.442695
        %v735 = vpow.pop %v734
        %v736 = vmul.f32 %v716, 1.442695
        %v737 = vpow.pop %v736
        %v738 = vmul.f32 %v717, 1.442695
        %v739 = vpow.pop %v738
        %v740 = vmul.f32 %v718, 1.442695
        %v741 = vpow.pop %v740
        %v742 = vmul.f32 %v719, 1.442695
        %v743 = vpow.pop %v742
        %v744 = vmul.f32 %v720, 1.442695
        %v745 = vpow.pop %v744
        %v746 = vmul.f32 %v721, 1.442695
        %v747 = vpow.pop %v746
        %v748 = vmul.f32 %v722, 1.442695
        %v749 = vpow.pop %v748
        %v750 = vmul.f32 %v723, 1.442695
        %v751 = vpow.pop %v750
        %v752 = vmul.f32 %v724, 1.442695
        %v753 = vpow.pop %v752
        %v754 = vmul.f32 %v725, 1.442695
        %v755 = vpow.pop %v754
        %v756 = vmul.f32 %v726, 1.442695
        %v757 = vpow.pop %v756
        %v758 = vmul.f32 %v727, 1.442695
        %v759 = vpow.pop %v758
        %760 = vst.msk [vmem:[#allocation2] sm:$0xff] %vm582, %v729
        %761 = vst.msk [vmem:[#allocation2 + $0x8] sm:$0xff] %vm582, %v731
        %762 = vst.msk [vmem:[#allocation2 + $0x20] sm:$0xff] %vm582, %v733
        %763 = vst.msk [vmem:[#allocation2 + $0x28] sm:$0xff] %vm582, %v735
        %764 = vst.msk [vmem:[#allocation2 + $0x40] sm:$0xff] %vm582, %v737
        %765 = vst.msk [vmem:[#allocation2 + $0x48] sm:$0xff] %vm582, %v739
        %766 = vst.msk [vmem:[#allocation2 + $0x60] sm:$0xff] %vm582, %v741
        %767 = vst.msk [vmem:[#allocation2 + $0x68] sm:$0xff] %vm582, %v743
        %768 = vst.msk [vmem:[#allocation2 + $0x80] sm:$0xff] %vm582, %v745
        %769 = vst.msk [vmem:[#allocation2 + $0x88] sm:$0xff] %vm582, %v747
        %770 = vst.msk [vmem:[#allocation2 + $0xa0] sm:$0xff] %vm582, %v749
        %771 = vst.msk [vmem:[#allocation2 + $0xa8] sm:$0xff] %vm582, %v751
        %772 = vst.msk [vmem:[#allocation2 + $0xc0] sm:$0xff] %vm582, %v753
        %773 = vst.msk [vmem:[#allocation2 + $0xc8] sm:$0xff] %vm582, %v755
        %774 = vst.msk [vmem:[#allocation2 + $0xe0] sm:$0xff] %vm582, %v757
        %775 = vst.msk [vmem:[#allocation2 + $0xe8] sm:$0xff] %vm582, %v759
        %v776 = vlaneseq
        %v777 = vshrl.u32 %v776, 7
        %v778 = vsub.s32 0, %v777
        %v779 = vrot.slane %v621, %v778
        %s781 = sor.u32 256, 64
        %782 = vbcast.lane.b32.xlu0 %v779, %s781
        %v783 = vpop.permute.xlu0 %782
        %s785 = sor.u32 256, 72
        %786 = vbcast.lane.b32.xlu0 %v779, %s785
        %v787 = vpop.permute.xlu0 %786
        %v788 = vlaneseq
        %v789 = vshrl.u32 %v788, 7
        %v790 = vsub.s32 1, %v789
        %v791 = vrot.slane %v621, %v790
        %s793 = sor.u32 256, 64
        %794 = vbcast.lane.b32.xlu0 %v791, %s793
        %v795 = vpop.permute.xlu0 %794
        %s797 = sor.u32 256, 72
        %798 = vbcast.lane.b32.xlu0 %v791, %s797
        %v799 = vpop.permute.xlu0 %798
        %v800 = vlaneseq
        %v801 = vshrl.u32 %v800, 7
        %v802 = vsub.s32 2, %v801
        %v803 = vrot.slane %v621, %v802
        %s805 = sor.u32 256, 64
        %806 = vbcast.lane.b32.xlu0 %v803, %s805
        %v807 = vpop.permute.xlu0 %806
        %s809 = sor.u32 256, 72
        %810 = vbcast.lane.b32.xlu0 %v803, %s809
        %v811 = vpop.permute.xlu0 %810
        %v812 = vlaneseq
        %v813 = vshrl.u32 %v812, 7
        %v814 = vsub.s32 3, %v813
        %v815 = vrot.slane %v621, %v814
        %s817 = sor.u32 256, 64
        %818 = vbcast.lane.b32.xlu0 %v815, %s817
        %v819 = vpop.permute.xlu0 %818
        %s821 = sor.u32 256, 72
        %822 = vbcast.lane.b32.xlu0 %v815, %s821
        %v823 = vpop.permute.xlu0 %822
        %v824 = vlaneseq
        %v825 = vshrl.u32 %v824, 7
        %v826 = vsub.s32 4, %v825
        %v827 = vrot.slane %v621, %v826
        %s829 = sor.u32 256, 64
        %830 = vbcast.lane.b32.xlu0 %v827, %s829
        %v831 = vpop.permute.xlu0 %830
        %s833 = sor.u32 256, 72
        %834 = vbcast.lane.b32.xlu0 %v827, %s833
        %v835 = vpop.permute.xlu0 %834
        %v836 = vlaneseq
        %v837 = vshrl.u32 %v836, 7
        %v838 = vsub.s32 5, %v837
        %v839 = vrot.slane %v621, %v838
        %s841 = sor.u32 256, 64
        %842 = vbcast.lane.b32.xlu0 %v839, %s841
        %v843 = vpop.permute.xlu0 %842
        %s845 = sor.u32 256, 72
        %846 = vbcast.lane.b32.xlu0 %v839, %s845
        %v847 = vpop.permute.xlu0 %846
        %v848 = vlaneseq
        %v849 = vshrl.u32 %v848, 7
        %v850 = vsub.s32 6, %v849
        %v851 = vrot.slane %v621, %v850
        %s853 = sor.u32 256, 64
        %854 = vbcast.lane.b32.xlu0 %v851, %s853
        %v855 = vpop.permute.xlu0 %854
        %s857 = sor.u32 256, 72
        %858 = vbcast.lane.b32.xlu0 %v851, %s857
        %v859 = vpop.permute.xlu0 %858
        %v860 = vlaneseq
        %v861 = vshrl.u32 %v860, 7
        %v862 = vsub.s32 7, %v861
        %v863 = vrot.slane %v621, %v862
        %s865 = sor.u32 256, 64
        %866 = vbcast.lane.b32.xlu0 %v863, %s865
        %v867 = vpop.permute.xlu0 %866
        %s869 = sor.u32 256, 72
        %870 = vbcast.lane.b32.xlu0 %v863, %s869
        %v871 = vpop.permute.xlu0 %870
        %v873 = vcombine.high %v669, %v669
        %v875 = vunpack.c.l.s4 1966171168
        %v876 = vunpack.c.0.s8 %v875
        %v877 = vlaneseq
        %v878 = vshrl.u32 %v877, 7
        %v879 = vsub.s32 %v876, %v878
        %v880 = vrot.slane %v669, %v879
        %v882 = vunpack.c.l.s4 1966171168
        %v883 = vunpack.c.0.s8 %v882
        %v884 = vlaneseq
        %v885 = vshrl.u32 %v884, 7
        %v886 = vsub.s32 %v883, %v885
        %v887 = vrot.slane %v873, %v886
        %v888 = vcombine.high %v880, %v880
        %v889 = vcombine.high %v887, %v887
        %v891 = vunpack.c.l.s4 1966171168
        %v892 = vunpack.c.0.s8 %v891
        %v893 = vlaneseq
        %v894 = vshrl.u32 %v893, 7
        %v895 = vsub.s32 %v892, %v894
        %v896 = vrot.slane %v880, %v895
        %v898 = vunpack.c.l.s4 1966171168
        %v899 = vunpack.c.0.s8 %v898
        %v900 = vlaneseq
        %v901 = vshrl.u32 %v900, 7
        %v902 = vsub.s32 %v899, %v901
        %v903 = vrot.slane %v887, %v902
        %v905 = vunpack.c.l.s4 1966171168
        %v906 = vunpack.c.0.s8 %v905
        %v907 = vlaneseq
        %v908 = vshrl.u32 %v907, 7
        %v909 = vsub.s32 %v906, %v908
        %v910 = vrot.slane %v888, %v909
        %v912 = vunpack.c.l.s4 1966171168
        %v913 = vunpack.c.0.s8 %v912
        %v914 = vlaneseq
        %v915 = vshrl.u32 %v914, 7
        %v916 = vsub.s32 %v913, %v915
        %v917 = vrot.slane %v889, %v916
        %v918 = vcombine.high %v896, %v896
        %v919 = vcombine.high %v903, %v903
        %v920 = vcombine.high %v910, %v910
        %v921 = vcombine.high %v917, %v917
        %v922 = vlaneseq
        %v923 = vshrl.u32 %v922, 7
        %v924 = vsub.s32 0, %v923
        %v925 = vrot.slane %v896, %v924
        %v926 = vlaneseq
        %v927 = vshrl.u32 %v926, 7
        %v928 = vsub.s32 0, %v927
        %v929 = vrot.slane %v910, %v928
        %v930 = vlaneseq
        %v931 = vshrl.u32 %v930, 7
        %v932 = vsub.s32 0, %v931
        %v933 = vrot.slane %v918, %v932
        %v934 = vlaneseq
        %v935 = vshrl.u32 %v934, 7
        %v936 = vsub.s32 0, %v935
        %v937 = vrot.slane %v920, %v936
        %v938 = vlaneseq
        %v939 = vshrl.u32 %v938, 7
        %v940 = vsub.s32 0, %v939
        %v941 = vrot.slane %v903, %v940
        %v942 = vlaneseq
        %v943 = vshrl.u32 %v942, 7
        %v944 = vsub.s32 0, %v943
        %v945 = vrot.slane %v917, %v944
        %v946 = vlaneseq
        %v947 = vshrl.u32 %v946, 7
        %v948 = vsub.s32 0, %v947
        %v949 = vrot.slane %v919, %v948
        %v950 = vlaneseq
        %v951 = vshrl.u32 %v950, 7
        %v952 = vsub.s32 0, %v951
        %v953 = vrot.slane %v921, %v952
        %v962 = vmul.f32 %v783, %v925
        %v963 = vmul.f32 %v787, %v925
        %v964 = vmul.f32 %v795, %v929
        %v965 = vmul.f32 %v799, %v929
        %v966 = vmul.f32 %v807, %v933
        %v967 = vmul.f32 %v811, %v933
        %v968 = vmul.f32 %v819, %v937
        %v969 = vmul.f32 %v823, %v937
        %v970 = vmul.f32 %v831, %v941
        %v971 = vmul.f32 %v835, %v941
        %v972 = vmul.f32 %v843, %v945
        %v973 = vmul.f32 %v847, %v945
        %v974 = vmul.f32 %v855, %v949
        %v975 = vmul.f32 %v859, %v949
        %v976 = vmul.f32 %v867, %v953
        %v977 = vmul.f32 %v871, %v953
        %978 = vst.msk [vmem:[#allocation3] sm:$0xff] %vm582, %v962
        %979 = vst.msk [vmem:[#allocation3 + $0x8] sm:$0xff] %vm582, %v963
        %980 = vst.msk [vmem:[#allocation3 + $0x20] sm:$0xff] %vm582, %v964
        %981 = vst.msk [vmem:[#allocation3 + $0x28] sm:$0xff] %vm582, %v965
        %982 = vst.msk [vmem:[#allocation3 + $0x40] sm:$0xff] %vm582, %v966
        %983 = vst.msk [vmem:[#allocation3 + $0x48] sm:$0xff] %vm582, %v967
        %984 = vst.msk [vmem:[#allocation3 + $0x60] sm:$0xff] %vm582, %v968
        %985 = vst.msk [vmem:[#allocation3 + $0x68] sm:$0xff] %vm582, %v969
        %986 = vst.msk [vmem:[#allocation3 + $0x80] sm:$0xff] %vm582, %v970
        %987 = vst.msk [vmem:[#allocation3 + $0x88] sm:$0xff] %vm582, %v971
        %988 = vst.msk [vmem:[#allocation3 + $0xa0] sm:$0xff] %vm582, %v972
        %989 = vst.msk [vmem:[#allocation3 + $0xa8] sm:$0xff] %vm582, %v973
        %990 = vst.msk [vmem:[#allocation3 + $0xc0] sm:$0xff] %vm582, %v974
        %991 = vst.msk [vmem:[#allocation3 + $0xc8] sm:$0xff] %vm582, %v975
        %992 = vst.msk [vmem:[#allocation3 + $0xe0] sm:$0xff] %vm582, %v976
        %993 = vst.msk [vmem:[#allocation3 + $0xe8] sm:$0xff] %vm582, %v977
        %s995 = sor.u32 256, 80
        %996 = vbcast.lane.b32.xlu0 %v779, %s995
        %v997 = vpop.permute.xlu0 %996
        %s999 = sor.u32 256, 88
        %1000 = vbcast.lane.b32.xlu0 %v779, %s999
        %v1001 = vpop.permute.xlu0 %1000
        %s1003 = sor.u32 256, 80
        %1004 = vbcast.lane.b32.xlu0 %v791, %s1003
        %v1005 = vpop.permute.xlu0 %1004
        %s1007 = sor.u32 256, 88
        %1008 = vbcast.lane.b32.xlu0 %v791, %s1007
        %v1009 = vpop.permute.xlu0 %1008
        %s1011 = sor.u32 256, 80
        %1012 = vbcast.lane.b32.xlu0 %v803, %s1011
        %v1013 = vpop.permute.xlu0 %1012
        %s1015 = sor.u32 256, 88
        %1016 = vbcast.lane.b32.xlu0 %v803, %s1015
        %v1017 = vpop.permute.xlu0 %1016
        %s1019 = sor.u32 256, 80
        %1020 = vbcast.lane.b32.xlu0 %v815, %s1019
        %v1021 = vpop.permute.xlu0 %1020
        %s1023 = sor.u32 256, 88
        %1024 = vbcast.lane.b32.xlu0 %v815, %s1023
        %v1025 = vpop.permute.xlu0 %1024
        %s1027 = sor.u32 256, 80
        %1028 = vbcast.lane.b32.xlu0 %v827, %s1027
        %v1029 = vpop.permute.xlu0 %1028
        %s1031 = sor.u32 256, 88
        %1032 = vbcast.lane.b32.xlu0 %v827, %s1031
        %v1033 = vpop.permute.xlu0 %1032
        %s1035 = sor.u32 256, 80
        %1036 = vbcast.lane.b32.xlu0 %v839, %s1035
        %v1037 = vpop.permute.xlu0 %1036
        %s1039 = sor.u32 256, 88
        %1040 = vbcast.lane.b32.xlu0 %v839, %s1039
        %v1041 = vpop.permute.xlu0 %1040
        %s1043 = sor.u32 256, 80
        %1044 = vbcast.lane.b32.xlu0 %v851, %s1043
        %v1045 = vpop.permute.xlu0 %1044
        %s1047 = sor.u32 256, 88
        %1048 = vbcast.lane.b32.xlu0 %v851, %s1047
        %v1049 = vpop.permute.xlu0 %1048
        %s1051 = sor.u32 256, 80
        %1052 = vbcast.lane.b32.xlu0 %v863, %s1051
        %v1053 = vpop.permute.xlu0 %1052
        %s1055 = sor.u32 256, 88
        %1056 = vbcast.lane.b32.xlu0 %v863, %s1055
        %v1057 = vpop.permute.xlu0 %1056
        %1058 = vst.msk [vmem:[#allocation4] sm:$0xff] %vm582, %v997
        %1059 = vst.msk [vmem:[#allocation4 + $0x8] sm:$0xff] %vm582, %v1001
        %1060 = vst.msk [vmem:[#allocation4 + $0x20] sm:$0xff] %vm582, %v1005
        %1061 = vst.msk [vmem:[#allocation4 + $0x28] sm:$0xff] %vm582, %v1009
        %1062 = vst.msk [vmem:[#allocation4 + $0x40] sm:$0xff] %vm582, %v1013
        %1063 = vst.msk [vmem:[#allocation4 + $0x48] sm:$0xff] %vm582, %v1017
        %1064 = vst.msk [vmem:[#allocation4 + $0x60] sm:$0xff] %vm582, %v1021
        %1065 = vst.msk [vmem:[#allocation4 + $0x68] sm:$0xff] %vm582, %v1025
        %1066 = vst.msk [vmem:[#allocation4 + $0x80] sm:$0xff] %vm582, %v1029
        %1067 = vst.msk [vmem:[#allocation4 + $0x88] sm:$0xff] %vm582, %v1033
        %1068 = vst.msk [vmem:[#allocation4 + $0xa0] sm:$0xff] %vm582, %v1037
        %1069 = vst.msk [vmem:[#allocation4 + $0xa8] sm:$0xff] %vm582, %v1041
        %1070 = vst.msk [vmem:[#allocation4 + $0xc0] sm:$0xff] %vm582, %v1045
        %1071 = vst.msk [vmem:[#allocation4 + $0xc8] sm:$0xff] %vm582, %v1049
        %1072 = vst.msk [vmem:[#allocation4 + $0xe0] sm:$0xff] %vm582, %v1053
        %1073 = vst.msk [vmem:[#allocation4 + $0xe8] sm:$0xff] %vm582, %v1057
        %v1075 = vlaneseq
        %v1076 = vshrl.u32 %v1075, 7
        %v1077 = vsub.s32 0, %v1076
        %v1078 = vrot.slane %v668, %v1077
        %v1079 = vlaneseq
        %v1080 = vshrl.u32 %v1079, 7
        %v1081 = vsub.s32 1, %v1080
        %v1082 = vrot.slane %v668, %v1081
        %v1083 = vlaneseq
        %v1084 = vshrl.u32 %v1083, 7
        %v1085 = vsub.s32 2, %v1084
        %v1086 = vrot.slane %v668, %v1085
        %v1087 = vlaneseq
        %v1088 = vshrl.u32 %v1087, 7
        %v1089 = vsub.s32 3, %v1088
        %v1090 = vrot.slane %v668, %v1089
        %v1091 = vlaneseq
        %v1092 = vshrl.u32 %v1091, 7
        %v1093 = vsub.s32 4, %v1092
        %v1094 = vrot.slane %v668, %v1093
        %v1095 = vlaneseq
        %v1096 = vshrl.u32 %v1095, 7
        %v1097 = vsub.s32 5, %v1096
        %v1098 = vrot.slane %v668, %v1097
        %v1099 = vlaneseq
        %v1100 = vshrl.u32 %v1099, 7
        %v1101 = vsub.s32 6, %v1100
        %v1102 = vrot.slane %v668, %v1101
        %v1103 = vlaneseq
        %v1104 = vshrl.u32 %v1103, 7
        %v1105 = vsub.s32 7, %v1104
        %v1106 = vrot.slane %v668, %v1105
        %v1115 = vmul.f32 %v1078, %v394
        %v1116 = vmul.f32 %v1078, %v395
        %v1117 = vmul.f32 %v1082, %v394
        %v1118 = vmul.f32 %v1082, %v395
        %v1119 = vmul.f32 %v1086, %v394
        %v1120 = vmul.f32 %v1086, %v395
        %v1121 = vmul.f32 %v1090, %v394
        %v1122 = vmul.f32 %v1090, %v395
        %v1123 = vmul.f32 %v1094, %v394
        %v1124 = vmul.f32 %v1094, %v395
        %v1125 = vmul.f32 %v1098, %v394
        %v1126 = vmul.f32 %v1098, %v395
        %v1127 = vmul.f32 %v1102, %v394
        %v1128 = vmul.f32 %v1102, %v395
        %v1129 = vmul.f32 %v1106, %v394
        %v1130 = vmul.f32 %v1106, %v395
        %v1131 = vmul.f32 %v1115, 1.442695
        %v1132 = vpow.pop %v1131
        %v1133 = vmul.f32 %v1116, 1.442695
        %v1134 = vpow.pop %v1133
        %v1135 = vmul.f32 %v1117, 1.442695
        %v1136 = vpow.pop %v1135
        %v1137 = vmul.f32 %v1118, 1.442695
        %v1138 = vpow.pop %v1137
        %v1139 = vmul.f32 %v1119, 1.442695
        %v1140 = vpow.pop %v1139
        %v1141 = vmul.f32 %v1120, 1.442695
        %v1142 = vpow.pop %v1141
        %v1143 = vmul.f32 %v1121, 1.442695
        %v1144 = vpow.pop %v1143
        %v1145 = vmul.f32 %v1122, 1.442695
        %v1146 = vpow.pop %v1145
        %v1147 = vmul.f32 %v1123, 1.442695
        %v1148 = vpow.pop %v1147
        %v1149 = vmul.f32 %v1124, 1.442695
        %v1150 = vpow.pop %v1149
        %v1151 = vmul.f32 %v1125, 1.442695
        %v1152 = vpow.pop %v1151
        %v1153 = vmul.f32 %v1126, 1.442695
        %v1154 = vpow.pop %v1153
        %v1155 = vmul.f32 %v1127, 1.442695
        %v1156 = vpow.pop %v1155
        %v1157 = vmul.f32 %v1128, 1.442695
        %v1158 = vpow.pop %v1157
        %v1159 = vmul.f32 %v1129, 1.442695
        %v1160 = vpow.pop %v1159
        %v1161 = vmul.f32 %v1130, 1.442695
        %v1162 = vpow.pop %v1161
        %s1163 = scalar_lea.vmem [#allocation2], 16
        %1164 = vst.msk [vmem:[%s1163] sm:$0xff] %vm582, %v1132
        %1165 = vst.msk [vmem:[%s1163 + $0x8] sm:$0xff] %vm582, %v1134
        %1166 = vst.msk [vmem:[%s1163 + $0x20] sm:$0xff] %vm582, %v1136
        %1167 = vst.msk [vmem:[%s1163 + $0x28] sm:$0xff] %vm582, %v1138
        %1168 = vst.msk [vmem:[%s1163 + $0x40] sm:$0xff] %vm582, %v1140
        %1169 = vst.msk [vmem:[%s1163 + $0x48] sm:$0xff] %vm582, %v1142
        %1170 = vst.msk [vmem:[%s1163 + $0x60] sm:$0xff] %vm582, %v1144
        %1171 = vst.msk [vmem:[%s1163 + $0x68] sm:$0xff] %vm582, %v1146
        %1172 = vst.msk [vmem:[%s1163 + $0x80] sm:$0xff] %vm582, %v1148
        %1173 = vst.msk [vmem:[%s1163 + $0x88] sm:$0xff] %vm582, %v1150
        %1174 = vst.msk [vmem:[%s1163 + $0xa0] sm:$0xff] %vm582, %v1152
        %1175 = vst.msk [vmem:[%s1163 + $0xa8] sm:$0xff] %vm582, %v1154
        %1176 = vst.msk [vmem:[%s1163 + $0xc0] sm:$0xff] %vm582, %v1156
        %1177 = vst.msk [vmem:[%s1163 + $0xc8] sm:$0xff] %vm582, %v1158
        %1178 = vst.msk [vmem:[%s1163 + $0xe0] sm:$0xff] %vm582, %v1160
        %1179 = vst.msk [vmem:[%s1163 + $0xe8] sm:$0xff] %vm582, %v1162
        %v1180 = vlaneseq
        %v1181 = vshrl.u32 %v1180, 7
        %v1182 = vsub.s32 0, %v1181
        %v1183 = vrot.slane %v624, %v1182
        %s1185 = sor.u32 256, 64
        %1186 = vbcast.lane.b32.xlu0 %v1183, %s1185
        %v1187 = vpop.permute.xlu0 %1186
        %s1189 = sor.u32 256, 72
        %1190 = vbcast.lane.b32.xlu0 %v1183, %s1189
        %v1191 = vpop.permute.xlu0 %1190
        %v1192 = vlaneseq
        %v1193 = vshrl.u32 %v1192, 7
        %v1194 = vsub.s32 1, %v1193
        %v1195 = vrot.slane %v624, %v1194
        %s1197 = sor.u32 256, 64
        %1198 = vbcast.lane.b32.xlu0 %v1195, %s1197
        %v1199 = vpop.permute.xlu0 %1198
        %s1201 = sor.u32 256, 72
        %1202 = vbcast.lane.b32.xlu0 %v1195, %s1201
        %v1203 = vpop.permute.xlu0 %1202
        %v1204 = vlaneseq
        %v1205 = vshrl.u32 %v1204, 7
        %v1206 = vsub.s32 2, %v1205
        %v1207 = vrot.slane %v624, %v1206
        %s1209 = sor.u32 256, 64
        %1210 = vbcast.lane.b32.xlu0 %v1207, %s1209
        %v1211 = vpop.permute.xlu0 %1210
        %s1213 = sor.u32 256, 72
        %1214 = vbcast.lane.b32.xlu0 %v1207, %s1213
        %v1215 = vpop.permute.xlu0 %1214
        %v1216 = vlaneseq
        %v1217 = vshrl.u32 %v1216, 7
        %v1218 = vsub.s32 3, %v1217
        %v1219 = vrot.slane %v624, %v1218
        %s1221 = sor.u32 256, 64
        %1222 = vbcast.lane.b32.xlu0 %v1219, %s1221
        %v1223 = vpop.permute.xlu0 %1222
        %s1225 = sor.u32 256, 72
        %1226 = vbcast.lane.b32.xlu0 %v1219, %s1225
        %v1227 = vpop.permute.xlu0 %1226
        %v1228 = vlaneseq
        %v1229 = vshrl.u32 %v1228, 7
        %v1230 = vsub.s32 4, %v1229
        %v1231 = vrot.slane %v624, %v1230
        %s1233 = sor.u32 256, 64
        %1234 = vbcast.lane.b32.xlu0 %v1231, %s1233
        %v1235 = vpop.permute.xlu0 %1234
        %s1237 = sor.u32 256, 72
        %1238 = vbcast.lane.b32.xlu0 %v1231, %s1237
        %v1239 = vpop.permute.xlu0 %1238
        %v1240 = vlaneseq
        %v1241 = vshrl.u32 %v1240, 7
        %v1242 = vsub.s32 5, %v1241
        %v1243 = vrot.slane %v624, %v1242
        %s1245 = sor.u32 256, 64
        %1246 = vbcast.lane.b32.xlu0 %v1243, %s1245
        %v1247 = vpop.permute.xlu0 %1246
        %s1249 = sor.u32 256, 72
        %1250 = vbcast.lane.b32.xlu0 %v1243, %s1249
        %v1251 = vpop.permute.xlu0 %1250
        %v1252 = vlaneseq
        %v1253 = vshrl.u32 %v1252, 7
        %v1254 = vsub.s32 6, %v1253
        %v1255 = vrot.slane %v624, %v1254
        %s1257 = sor.u32 256, 64
        %1258 = vbcast.lane.b32.xlu0 %v1255, %s1257
        %v1259 = vpop.permute.xlu0 %1258
        %s1261 = sor.u32 256, 72
        %1262 = vbcast.lane.b32.xlu0 %v1255, %s1261
        %v1263 = vpop.permute.xlu0 %1262
        %v1264 = vlaneseq
        %v1265 = vshrl.u32 %v1264, 7
        %v1266 = vsub.s32 7, %v1265
        %v1267 = vrot.slane %v624, %v1266
        %s1269 = sor.u32 256, 64
        %1270 = vbcast.lane.b32.xlu0 %v1267, %s1269
        %v1271 = vpop.permute.xlu0 %1270
        %s1273 = sor.u32 256, 72
        %1274 = vbcast.lane.b32.xlu0 %v1267, %s1273
        %v1275 = vpop.permute.xlu0 %1274
        %v1277 = vcombine.high %v670, %v670
        %v1279 = vunpack.c.l.s4 1966171168
        %v1280 = vunpack.c.0.s8 %v1279
        %v1281 = vlaneseq
        %v1282 = vshrl.u32 %v1281, 7
        %v1283 = vsub.s32 %v1280, %v1282
        %v1284 = vrot.slane %v670, %v1283
        %v1286 = vunpack.c.l.s4 1966171168
        %v1287 = vunpack.c.0.s8 %v1286
        %v1288 = vlaneseq
        %v1289 = vshrl.u32 %v1288, 7
        %v1290 = vsub.s32 %v1287, %v1289
        %v1291 = vrot.slane %v1277, %v1290
        %v1292 = vcombine.high %v1284, %v1284
        %v1293 = vcombine.high %v1291, %v1291
        %v1295 = vunpack.c.l.s4 1966171168
        %v1296 = vunpack.c.0.s8 %v1295
        %v1297 = vlaneseq
        %v1298 = vshrl.u32 %v1297, 7
        %v1299 = vsub.s32 %v1296, %v1298
        %v1300 = vrot.slane %v1284, %v1299
        %v1302 = vunpack.c.l.s4 1966171168
        %v1303 = vunpack.c.0.s8 %v1302
        %v1304 = vlaneseq
        %v1305 = vshrl.u32 %v1304, 7
        %v1306 = vsub.s32 %v1303, %v1305
        %v1307 = vrot.slane %v1291, %v1306
        %v1309 = vunpack.c.l.s4 1966171168
        %v1310 = vunpack.c.0.s8 %v1309
        %v1311 = vlaneseq
        %v1312 = vshrl.u32 %v1311, 7
        %v1313 = vsub.s32 %v1310, %v1312
        %v1314 = vrot.slane %v1292, %v1313
        %v1316 = vunpack.c.l.s4 1966171168
        %v1317 = vunpack.c.0.s8 %v1316
        %v1318 = vlaneseq
        %v1319 = vshrl.u32 %v1318, 7
        %v1320 = vsub.s32 %v1317, %v1319
        %v1321 = vrot.slane %v1293, %v1320
        %v1322 = vcombine.high %v1300, %v1300
        %v1323 = vcombine.high %v1307, %v1307
        %v1324 = vcombine.high %v1314, %v1314
        %v1325 = vcombine.high %v1321, %v1321
        %v1326 = vlaneseq
        %v1327 = vshrl.u32 %v1326, 7
        %v1328 = vsub.s32 0, %v1327
        %v1329 = vrot.slane %v1300, %v1328
        %v1330 = vlaneseq
        %v1331 = vshrl.u32 %v1330, 7
        %v1332 = vsub.s32 0, %v1331
        %v1333 = vrot.slane %v1314, %v1332
        %v1334 = vlaneseq
        %v1335 = vshrl.u32 %v1334, 7
        %v1336 = vsub.s32 0, %v1335
        %v1337 = vrot.slane %v1322, %v1336
        %v1338 = vlaneseq
        %v1339 = vshrl.u32 %v1338, 7
        %v1340 = vsub.s32 0, %v1339
        %v1341 = vrot.slane %v1324, %v1340
        %v1342 = vlaneseq
        %v1343 = vshrl.u32 %v1342, 7
        %v1344 = vsub.s32 0, %v1343
        %v1345 = vrot.slane %v1307, %v1344
        %v1346 = vlaneseq
        %v1347 = vshrl.u32 %v1346, 7
        %v1348 = vsub.s32 0, %v1347
        %v1349 = vrot.slane %v1321, %v1348
        %v1350 = vlaneseq
        %v1351 = vshrl.u32 %v1350, 7
        %v1352 = vsub.s32 0, %v1351
        %v1353 = vrot.slane %v1323, %v1352
        %v1354 = vlaneseq
        %v1355 = vshrl.u32 %v1354, 7
        %v1356 = vsub.s32 0, %v1355
        %v1357 = vrot.slane %v1325, %v1356
        %v1366 = vmul.f32 %v1187, %v1329
        %v1367 = vmul.f32 %v1191, %v1329
        %v1368 = vmul.f32 %v1199, %v1333
        %v1369 = vmul.f32 %v1203, %v1333
        %v1370 = vmul.f32 %v1211, %v1337
        %v1371 = vmul.f32 %v1215, %v1337
        %v1372 = vmul.f32 %v1223, %v1341
        %v1373 = vmul.f32 %v1227, %v1341
        %v1374 = vmul.f32 %v1235, %v1345
        %v1375 = vmul.f32 %v1239, %v1345
        %v1376 = vmul.f32 %v1247, %v1349
        %v1377 = vmul.f32 %v1251, %v1349
        %v1378 = vmul.f32 %v1259, %v1353
        %v1379 = vmul.f32 %v1263, %v1353
        %v1380 = vmul.f32 %v1271, %v1357
        %v1381 = vmul.f32 %v1275, %v1357
        %s1382 = scalar_lea.vmem [#allocation3], 16
        %1383 = vst.msk [vmem:[%s1382] sm:$0xff] %vm582, %v1366
        %1384 = vst.msk [vmem:[%s1382 + $0x8] sm:$0xff] %vm582, %v1367
        %1385 = vst.msk [vmem:[%s1382 + $0x20] sm:$0xff] %vm582, %v1368
        %1386 = vst.msk [vmem:[%s1382 + $0x28] sm:$0xff] %vm582, %v1369
        %1387 = vst.msk [vmem:[%s1382 + $0x40] sm:$0xff] %vm582, %v1370
        %1388 = vst.msk [vmem:[%s1382 + $0x48] sm:$0xff] %vm582, %v1371
        %1389 = vst.msk [vmem:[%s1382 + $0x60] sm:$0xff] %vm582, %v1372
        %1390 = vst.msk [vmem:[%s1382 + $0x68] sm:$0xff] %vm582, %v1373
        %1391 = vst.msk [vmem:[%s1382 + $0x80] sm:$0xff] %vm582, %v1374
        %1392 = vst.msk [vmem:[%s1382 + $0x88] sm:$0xff] %vm582, %v1375
        %1393 = vst.msk [vmem:[%s1382 + $0xa0] sm:$0xff] %vm582, %v1376
        %1394 = vst.msk [vmem:[%s1382 + $0xa8] sm:$0xff] %vm582, %v1377
        %1395 = vst.msk [vmem:[%s1382 + $0xc0] sm:$0xff] %vm582, %v1378
        %1396 = vst.msk [vmem:[%s1382 + $0xc8] sm:$0xff] %vm582, %v1379
        %1397 = vst.msk [vmem:[%s1382 + $0xe0] sm:$0xff] %vm582, %v1380
        %1398 = vst.msk [vmem:[%s1382 + $0xe8] sm:$0xff] %vm582, %v1381
        %s1400 = sor.u32 256, 80
        %1401 = vbcast.lane.b32.xlu0 %v1183, %s1400
        %v1402 = vpop.permute.xlu0 %1401
        %s1404 = sor.u32 256, 88
        %1405 = vbcast.lane.b32.xlu0 %v1183, %s1404
        %v1406 = vpop.permute.xlu0 %1405
        %s1408 = sor.u32 256, 80
        %1409 = vbcast.lane.b32.xlu0 %v1195, %s1408
        %v1410 = vpop.permute.xlu0 %1409
        %s1412 = sor.u32 256, 88
        %1413 = vbcast.lane.b32.xlu0 %v1195, %s1412
        %v1414 = vpop.permute.xlu0 %1413
        %s1416 = sor.u32 256, 80
        %1417 = vbcast.lane.b32.xlu0 %v1207, %s1416
        %v1418 = vpop.permute.xlu0 %1417
        %s1420 = sor.u32 256, 88
        %1421 = vbcast.lane.b32.xlu0 %v1207, %s1420
        %v1422 = vpop.permute.xlu0 %1421
        %s1424 = sor.u32 256, 80
        %1425 = vbcast.lane.b32.xlu0 %v1219, %s1424
        %v1426 = vpop.permute.xlu0 %1425
        %s1428 = sor.u32 256, 88
        %1429 = vbcast.lane.b32.xlu0 %v1219, %s1428
        %v1430 = vpop.permute.xlu0 %1429
        %s1432 = sor.u32 256, 80
        %1433 = vbcast.lane.b32.xlu0 %v1231, %s1432
        %v1434 = vpop.permute.xlu0 %1433
        %s1436 = sor.u32 256, 88
        %1437 = vbcast.lane.b32.xlu0 %v1231, %s1436
        %v1438 = vpop.permute.xlu0 %1437
        %s1440 = sor.u32 256, 80
        %1441 = vbcast.lane.b32.xlu0 %v1243, %s1440
        %v1442 = vpop.permute.xlu0 %1441
        %s1444 = sor.u32 256, 88
        %1445 = vbcast.lane.b32.xlu0 %v1243, %s1444
        %v1446 = vpop.permute.xlu0 %1445
        %s1448 = sor.u32 256, 80
        %1449 = vbcast.lane.b32.xlu0 %v1255, %s1448
        %v1450 = vpop.permute.xlu0 %1449
        %s1452 = sor.u32 256, 88
        %1453 = vbcast.lane.b32.xlu0 %v1255, %s1452
        %v1454 = vpop.permute.xlu0 %1453
        %s1456 = sor.u32 256, 80
        %1457 = vbcast.lane.b32.xlu0 %v1267, %s1456
        %v1458 = vpop.permute.xlu0 %1457
        %s1460 = sor.u32 256, 88
        %1461 = vbcast.lane.b32.xlu0 %v1267, %s1460
        %v1462 = vpop.permute.xlu0 %1461
        %s1463 = scalar_lea.vmem [#allocation4], 16
        %1464 = vst.msk [vmem:[%s1463] sm:$0xff] %vm582, %v1402
        %1465 = vst.msk [vmem:[%s1463 + $0x8] sm:$0xff] %vm582, %v1406
        %1466 = vst.msk [vmem:[%s1463 + $0x20] sm:$0xff] %vm582, %v1410
        %1467 = vst.msk [vmem:[%s1463 + $0x28] sm:$0xff] %vm582, %v1414
        %1468 = vst.msk [vmem:[%s1463 + $0x40] sm:$0xff] %vm582, %v1418
        %1469 = vst.msk [vmem:[%s1463 + $0x48] sm:$0xff] %vm582, %v1422
        %1470 = vst.msk [vmem:[%s1463 + $0x60] sm:$0xff] %vm582, %v1426
        %1471 = vst.msk [vmem:[%s1463 + $0x68] sm:$0xff] %vm582, %v1430
        %1472 = vst.msk [vmem:[%s1463 + $0x80] sm:$0xff] %vm582, %v1434
        %1473 = vst.msk [vmem:[%s1463 + $0x88] sm:$0xff] %vm582, %v1438
        %1474 = vst.msk [vmem:[%s1463 + $0xa0] sm:$0xff] %vm582, %v1442
        %1475 = vst.msk [vmem:[%s1463 + $0xa8] sm:$0xff] %vm582, %v1446
        %1476 = vst.msk [vmem:[%s1463 + $0xc0] sm:$0xff] %vm582, %v1450
        %1477 = vst.msk [vmem:[%s1463 + $0xc8] sm:$0xff] %vm582, %v1454
        %1478 = vst.msk [vmem:[%s1463 + $0xe0] sm:$0xff] %vm582, %v1458
        %1479 = vst.msk [vmem:[%s1463 + $0xe8] sm:$0xff] %vm582, %v1462
        %v1480 = vld [vmem:[#allocation2] sm:$0xff]
        %v1481 = vld [vmem:[#allocation2 + $0x8] sm:$0xff]
        %v1482 = vld [vmem:[#allocation2 + $0x10] sm:$0xff]
        %v1483 = vld [vmem:[#allocation2 + $0x18] sm:$0xff]
        %v1484 = vmul.f32 %v1480, 0.0
        %v1485 = vmul.f32 %v1481, 0.0
        %v1486 = vmul.f32 %v1482, 0.0
        %v1487 = vmul.f32 %v1483, 0.0
        %v1488 = vld [vmem:[#allocation3] sm:$0xff]
        %v1489 = vld [vmem:[#allocation3 + $0x8] sm:$0xff]
        %v1490 = vld [vmem:[#allocation3 + $0x10] sm:$0xff]
        %v1491 = vld [vmem:[#allocation3 + $0x18] sm:$0xff]
        %v1492 = vadd.f32 %v1484, %v1488
        %v1493 = vadd.f32 %v1485, %v1489
        %v1494 = vadd.f32 %v1486, %v1490
        %v1495 = vadd.f32 %v1487, %v1491
        %v1496 = vld [vmem:[#allocation4] sm:$0xff]
        %v1497 = vld [vmem:[#allocation4 + $0x8] sm:$0xff]
        %v1498 = vld [vmem:[#allocation4 + $0x10] sm:$0xff]
        %v1499 = vld [vmem:[#allocation4 + $0x18] sm:$0xff]
        %v1500 = vmul.f32 %v1496, %v1492
        %v1501 = vmul.f32 %v1497, %v1493
        %v1502 = vmul.f32 %v1498, %v1494
        %v1503 = vmul.f32 %v1499, %v1495
        %v1504 = vsel %vm582, %v1500, 0.0
        %v1505 = vsel %vm582, %v1501, 0.0
        %v1506 = vadd.f32 %v1504, %v1505
        %v1507 = vrot.slane %v1506, 4
        %v1508 = vadd.f32 %v1506, %v1507
        %v1509 = vrot.slane %v1508, 2
        %v1510 = vadd.f32 %v1508, %v1509
        %v1511 = vrot.slane %v1510, 1
        %v1512 = vadd.f32 %v1510, %v1511
        %v1513 = vsel %vm582, %v1502, 0.0
        %v1514 = vsel %vm582, %v1503, 0.0
        %v1515 = vadd.f32 %v1513, %v1514
        %v1516 = vrot.slane %v1515, 4
        %v1517 = vadd.f32 %v1515, %v1516
        %v1518 = vrot.slane %v1517, 2
        %v1519 = vadd.f32 %v1517, %v1518
        %v1520 = vrot.slane %v1519, 1
        %v1521 = vadd.f32 %v1519, %v1520
        %vm1524 = vcmask 1041409
        %v1525 = vsel %vm1524, %v1521, %v1512
        %vm1527 = vcmask 517120
        %1528 = vst.msk [vmem:[#allocation5] sm:$0x3] %vm1527, %v1525
        %s1529 = scalar_lea.vmem [#allocation2], 32
        %v1530 = vld [vmem:[%s1529] sm:$0xff]
        %v1531 = vld [vmem:[%s1529 + $0x8] sm:$0xff]
        %v1532 = vld [vmem:[%s1529 + $0x10] sm:$0xff]
        %v1533 = vld [vmem:[%s1529 + $0x18] sm:$0xff]
        %v1534 = vmul.f32 %v1530, %v1492
        %v1535 = vmul.f32 %v1531, %v1493
        %v1536 = vmul.f32 %v1532, %v1494
        %v1537 = vmul.f32 %v1533, %v1495
        %s1538 = scalar_lea.vmem [#allocation3], 32
        %v1539 = vld [vmem:[%s1538] sm:$0xff]
        %v1540 = vld [vmem:[%s1538 + $0x8] sm:$0xff]
        %v1541 = vld [vmem:[%s1538 + $0x10] sm:$0xff]
        %v1542 = vld [vmem:[%s1538 + $0x18] sm:$0xff]
        %v1543 = vadd.f32 %v1534, %v1539
        %v1544 = vadd.f32 %v1535, %v1540
        %v1545 = vadd.f32 %v1536, %v1541
        %v1546 = vadd.f32 %v1537, %v1542
        %s1547 = scalar_lea.vmem [#allocation4], 32
        %v1548 = vld [vmem:[%s1547] sm:$0xff]
        %v1549 = vld [vmem:[%s1547 + $0x8] sm:$0xff]
        %v1550 = vld [vmem:[%s1547 + $0x10] sm:$0xff]
        %v1551 = vld [vmem:[%s1547 + $0x18] sm:$0xff]
        %v1552 = vmul.f32 %v1548, %v1543
        %v1553 = vmul.f32 %v1549, %v1544
        %v1554 = vmul.f32 %v1550, %v1545
        %v1555 = vmul.f32 %v1551, %v1546
        %v1556 = vsel %vm582, %v1552, 0.0
        %v1557 = vsel %vm582, %v1553, 0.0
        %v1558 = vadd.f32 %v1556, %v1557
        %v1559 = vrot.slane %v1558, 4
        %v1560 = vadd.f32 %v1558, %v1559
        %v1561 = vrot.slane %v1560, 2
        %v1562 = vadd.f32 %v1560, %v1561
        %v1563 = vrot.slane %v1562, 1
        %v1564 = vadd.f32 %v1562, %v1563
        %v1565 = vsel %vm582, %v1554, 0.0
        %v1566 = vsel %vm582, %v1555, 0.0
        %v1567 = vadd.f32 %v1565, %v1566
        %v1568 = vrot.slane %v1567, 4
        %v1569 = vadd.f32 %v1567, %v1568
        %v1570 = vrot.slane %v1569, 2
        %v1571 = vadd.f32 %v1569, %v1570
        %v1572 = vrot.slane %v1571, 1
        %v1573 = vadd.f32 %v1571, %v1572
        %v1576 = vsel %vm1524, %v1573, %v1564
        %s1578 = scalar_lea.vmem [#allocation5], 2
        %1579 = vst.msk [vmem:[%s1578] sm:$0x3] %vm1527, %v1576
        %s1580 = scalar_lea.vmem [#allocation2], 64
        %v1581 = vld [vmem:[%s1580] sm:$0xff]
        %v1582 = vld [vmem:[%s1580 + $0x8] sm:$0xff]
        %v1583 = vld [vmem:[%s1580 + $0x10] sm:$0xff]
        %v1584 = vld [vmem:[%s1580 + $0x18] sm:$0xff]
        %v1585 = vmul.f32 %v1581, %v1543
        %v1586 = vmul.f32 %v1582, %v1544
        %v1587 = vmul.f32 %v1583, %v1545
        %v1588 = vmul.f32 %v1584, %v1546
        %s1589 = scalar_lea.vmem [#allocation3], 64
        %v1590 = vld [vmem:[%s1589] sm:$0xff]
        %v1591 = vld [vmem:[%s1589 + $0x8] sm:$0xff]
        %v1592 = vld [vmem:[%s1589 + $0x10] sm:$0xff]
        %v1593 = vld [vmem:[%s1589 + $0x18] sm:$0xff]
        %v1594 = vadd.f32 %v1585, %v1590
        %v1595 = vadd.f32 %v1586, %v1591
        %v1596 = vadd.f32 %v1587, %v1592
        %v1597 = vadd.f32 %v1588, %v1593
        %s1598 = scalar_lea.vmem [#allocation4], 64
        %v1599 = vld [vmem:[%s1598] sm:$0xff]
        %v1600 = vld [vmem:[%s1598 + $0x8] sm:$0xff]
        %v1601 = vld [vmem:[%s1598 + $0x10] sm:$0xff]
        %v1602 = vld [vmem:[%s1598 + $0x18] sm:$0xff]
        %v1603 = vmul.f32 %v1599, %v1594
        %v1604 = vmul.f32 %v1600, %v1595
        %v1605 = vmul.f32 %v1601, %v1596
        %v1606 = vmul.f32 %v1602, %v1597
        %v1607 = vsel %vm582, %v1603, 0.0
        %v1608 = vsel %vm582, %v1604, 0.0
        %v1609 = vadd.f32 %v1607, %v1608
        %v1610 = vrot.slane %v1609, 4
        %v1611 = vadd.f32 %v1609, %v1610
        %v1612 = vrot.slane %v1611, 2
        %v1613 = vadd.f32 %v1611, %v1612
        %v1614 = vrot.slane %v1613, 1
        %v1615 = vadd.f32 %v1613, %v1614
        %v1616 = vsel %vm582, %v1605, 0.0
        %v1617 = vsel %vm582, %v1606, 0.0
        %v1618 = vadd.f32 %v1616, %v1617
        %v1619 = vrot.slane %v1618, 4
        %v1620 = vadd.f32 %v1618, %v1619
        %v1621 = vrot.slane %v1620, 2
        %v1622 = vadd.f32 %v1620, %v1621
        %v1623 = vrot.slane %v1622, 1
        %v1624 = vadd.f32 %v1622, %v1623
        %v1627 = vsel %vm1524, %v1624, %v1615
        %s1629 = scalar_lea.vmem [#allocation5], 4
        %1630 = vst.msk [vmem:[%s1629] sm:$0x3] %vm1527, %v1627
        %s1631 = scalar_lea.vmem [#allocation2], 96
        %v1632 = vld [vmem:[%s1631] sm:$0xff]
        %v1633 = vld [vmem:[%s1631 + $0x8] sm:$0xff]
        %v1634 = vld [vmem:[%s1631 + $0x10] sm:$0xff]
        %v1635 = vld [vmem:[%s1631 + $0x18] sm:$0xff]
        %v1636 = vmul.f32 %v1632, %v1594
        %v1637 = vmul.f32 %v1633, %v1595
        %v1638 = vmul.f32 %v1634, %v1596
        %v1639 = vmul.f32 %v1635, %v1597
        %s1640 = scalar_lea.vmem [#allocation3], 96
        %v1641 = vld [vmem:[%s1640] sm:$0xff]
        %v1642 = vld [vmem:[%s1640 + $0x8] sm:$0xff]
        %v1643 = vld [vmem:[%s1640 + $0x10] sm:$0xff]
        %v1644 = vld [vmem:[%s1640 + $0x18] sm:$0xff]
        %v1645 = vadd.f32 %v1636, %v1641
        %v1646 = vadd.f32 %v1637, %v1642
        %v1647 = vadd.f32 %v1638, %v1643
        %v1648 = vadd.f32 %v1639, %v1644
        %s1649 = scalar_lea.vmem [#allocation4], 96
        %v1650 = vld [vmem:[%s1649] sm:$0xff]
        %v1651 = vld [vmem:[%s1649 + $0x8] sm:$0xff]
        %v1652 = vld [vmem:[%s1649 + $0x10] sm:$0xff]
        %v1653 = vld [vmem:[%s1649 + $0x18] sm:$0xff]
        %v1654 = vmul.f32 %v1650, %v1645
        %v1655 = vmul.f32 %v1651, %v1646
        %v1656 = vmul.f32 %v1652, %v1647
        %v1657 = vmul.f32 %v1653, %v1648
        %v1658 = vsel %vm582, %v1654, 0.0
        %v1659 = vsel %vm582, %v1655, 0.0
        %v1660 = vadd.f32 %v1658, %v1659
        %v1661 = vrot.slane %v1660, 4
        %v1662 = vadd.f32 %v1660, %v1661
        %v1663 = vrot.slane %v1662, 2
        %v1664 = vadd.f32 %v1662, %v1663
        %v1665 = vrot.slane %v1664, 1
        %v1666 = vadd.f32 %v1664, %v1665
        %v1667 = vsel %vm582, %v1656, 0.0
        %v1668 = vsel %vm582, %v1657, 0.0
        %v1669 = vadd.f32 %v1667, %v1668
        %v1670 = vrot.slane %v1669, 4
        %v1671 = vadd.f32 %v1669, %v1670
        %v1672 = vrot.slane %v1671, 2
        %v1673 = vadd.f32 %v1671, %v1672
        %v1674 = vrot.slane %v1673, 1
        %v1675 = vadd.f32 %v1673, %v1674
        %v1678 = vsel %vm1524, %v1675, %v1666
        %s1680 = scalar_lea.vmem [#allocation5], 6
        %1681 = vst.msk [vmem:[%s1680] sm:$0x3] %vm1527, %v1678
        %s1682 = scalar_lea.vmem [#allocation2], 128
        %v1683 = vld [vmem:[%s1682] sm:$0xff]
        %v1684 = vld [vmem:[%s1682 + $0x8] sm:$0xff]
        %v1685 = vld [vmem:[%s1682 + $0x10] sm:$0xff]
        %v1686 = vld [vmem:[%s1682 + $0x18] sm:$0xff]
        %v1687 = vmul.f32 %v1683, %v1645
        %v1688 = vmul.f32 %v1684, %v1646
        %v1689 = vmul.f32 %v1685, %v1647
        %v1690 = vmul.f32 %v1686, %v1648
        %s1691 = scalar_lea.vmem [#allocation3], 128
        %v1692 = vld [vmem:[%s1691] sm:$0xff]
        %v1693 = vld [vmem:[%s1691 + $0x8] sm:$0xff]
        %v1694 = vld [vmem:[%s1691 + $0x10] sm:$0xff]
        %v1695 = vld [vmem:[%s1691 + $0x18] sm:$0xff]
        %v1696 = vadd.f32 %v1687, %v1692
        %v1697 = vadd.f32 %v1688, %v1693
        %v1698 = vadd.f32 %v1689, %v1694
        %v1699 = vadd.f32 %v1690, %v1695
        %s1700 = scalar_lea.vmem [#allocation4], 128
        %v1701 = vld [vmem:[%s1700] sm:$0xff]
        %v1702 = vld [vmem:[%s1700 + $0x8] sm:$0xff]
        %v1703 = vld [vmem:[%s1700 + $0x10] sm:$0xff]
        %v1704 = vld [vmem:[%s1700 + $0x18] sm:$0xff]
        %v1705 = vmul.f32 %v1701, %v1696
        %v1706 = vmul.f32 %v1702, %v1697
        %v1707 = vmul.f32 %v1703, %v1698
        %v1708 = vmul.f32 %v1704, %v1699
        %v1709 = vsel %vm582, %v1705, 0.0
        %v1710 = vsel %vm582, %v1706, 0.0
        %v1711 = vadd.f32 %v1709, %v1710
        %v1712 = vrot.slane %v1711, 4
        %v1713 = vadd.f32 %v1711, %v1712
        %v1714 = vrot.slane %v1713, 2
        %v1715 = vadd.f32 %v1713, %v1714
        %v1716 = vrot.slane %v1715, 1
        %v1717 = vadd.f32 %v1715, %v1716
        %v1718 = vsel %vm582, %v1707, 0.0
        %v1719 = vsel %vm582, %v1708, 0.0
        %v1720 = vadd.f32 %v1718, %v1719
        %v1721 = vrot.slane %v1720, 4
        %v1722 = vadd.f32 %v1720, %v1721
        %v1723 = vrot.slane %v1722, 2
        %v1724 = vadd.f32 %v1722, %v1723
        %v1725 = vrot.slane %v1724, 1
        %v1726 = vadd.f32 %v1724, %v1725
        %v1729 = vsel %vm1524, %v1726, %v1717
        %s1731 = scalar_lea.vmem [#allocation5], 8
        %1732 = vst.msk [vmem:[%s1731] sm:$0x3] %vm1527, %v1729
        %s1733 = scalar_lea.vmem [#allocation2], 160
        %v1734 = vld [vmem:[%s1733] sm:$0xff]
        %v1735 = vld [vmem:[%s1733 + $0x8] sm:$0xff]
        %v1736 = vld [vmem:[%s1733 + $0x10] sm:$0xff]
        %v1737 = vld [vmem:[%s1733 + $0x18] sm:$0xff]
        %v1738 = vmul.f32 %v1734, %v1696
        %v1739 = vmul.f32 %v1735, %v1697
        %v1740 = vmul.f32 %v1736, %v1698
        %v1741 = vmul.f32 %v1737, %v1699
        %s1742 = scalar_lea.vmem [#allocation3], 160
        %v1743 = vld [vmem:[%s1742] sm:$0xff]
        %v1744 = vld [vmem:[%s1742 + $0x8] sm:$0xff]
        %v1745 = vld [vmem:[%s1742 + $0x10] sm:$0xff]
        %v1746 = vld [vmem:[%s1742 + $0x18] sm:$0xff]
        %v1747 = vadd.f32 %v1738, %v1743
        %v1748 = vadd.f32 %v1739, %v1744
        %v1749 = vadd.f32 %v1740, %v1745
        %v1750 = vadd.f32 %v1741, %v1746
        %s1751 = scalar_lea.vmem [#allocation4], 160
        %v1752 = vld [vmem:[%s1751] sm:$0xff]
        %v1753 = vld [vmem:[%s1751 + $0x8] sm:$0xff]
        %v1754 = vld [vmem:[%s1751 + $0x10] sm:$0xff]
        %v1755 = vld [vmem:[%s1751 + $0x18] sm:$0xff]
        %v1756 = vmul.f32 %v1752, %v1747
        %v1757 = vmul.f32 %v1753, %v1748
        %v1758 = vmul.f32 %v1754, %v1749
        %v1759 = vmul.f32 %v1755, %v1750
        %v1760 = vsel %vm582, %v1756, 0.0
        %v1761 = vsel %vm582, %v1757, 0.0
        %v1762 = vadd.f32 %v1760, %v1761
        %v1763 = vrot.slane %v1762, 4
        %v1764 = vadd.f32 %v1762, %v1763
        %v1765 = vrot.slane %v1764, 2
        %v1766 = vadd.f32 %v1764, %v1765
        %v1767 = vrot.slane %v1766, 1
        %v1768 = vadd.f32 %v1766, %v1767
        %v1769 = vsel %vm582, %v1758, 0.0
        %v1770 = vsel %vm582, %v1759, 0.0
        %v1771 = vadd.f32 %v1769, %v1770
        %v1772 = vrot.slane %v1771, 4
        %v1773 = vadd.f32 %v1771, %v1772
        %v1774 = vrot.slane %v1773, 2
        %v1775 = vadd.f32 %v1773, %v1774
        %v1776 = vrot.slane %v1775, 1
        %v1777 = vadd.f32 %v1775, %v1776
        %v1780 = vsel %vm1524, %v1777, %v1768
        %s1782 = scalar_lea.vmem [#allocation5], 10
        %1783 = vst.msk [vmem:[%s1782] sm:$0x3] %vm1527, %v1780
        %s1784 = scalar_lea.vmem [#allocation2], 192
        %v1785 = vld [vmem:[%s1784] sm:$0xff]
        %v1786 = vld [vmem:[%s1784 + $0x8] sm:$0xff]
        %v1787 = vld [vmem:[%s1784 + $0x10] sm:$0xff]
        %v1788 = vld [vmem:[%s1784 + $0x18] sm:$0xff]
        %v1789 = vmul.f32 %v1785, %v1747
        %v1790 = vmul.f32 %v1786, %v1748
        %v1791 = vmul.f32 %v1787, %v1749
        %v1792 = vmul.f32 %v1788, %v1750
        %s1793 = scalar_lea.vmem [#allocation3], 192
        %v1794 = vld [vmem:[%s1793] sm:$0xff]
        %v1795 = vld [vmem:[%s1793 + $0x8] sm:$0xff]
        %v1796 = vld [vmem:[%s1793 + $0x10] sm:$0xff]
        %v1797 = vld [vmem:[%s1793 + $0x18] sm:$0xff]
        %v1798 = vadd.f32 %v1789, %v1794
        %v1799 = vadd.f32 %v1790, %v1795
        %v1800 = vadd.f32 %v1791, %v1796
        %v1801 = vadd.f32 %v1792, %v1797
        %s1802 = scalar_lea.vmem [#allocation4], 192
        %v1803 = vld [vmem:[%s1802] sm:$0xff]
        %v1804 = vld [vmem:[%s1802 + $0x8] sm:$0xff]
        %v1805 = vld [vmem:[%s1802 + $0x10] sm:$0xff]
        %v1806 = vld [vmem:[%s1802 + $0x18] sm:$0xff]
        %v1807 = vmul.f32 %v1803, %v1798
        %v1808 = vmul.f32 %v1804, %v1799
        %v1809 = vmul.f32 %v1805, %v1800
        %v1810 = vmul.f32 %v1806, %v1801
        %v1811 = vsel %vm582, %v1807, 0.0
        %v1812 = vsel %vm582, %v1808, 0.0
        %v1813 = vadd.f32 %v1811, %v1812
        %v1814 = vrot.slane %v1813, 4
        %v1815 = vadd.f32 %v1813, %v1814
        %v1816 = vrot.slane %v1815, 2
        %v1817 = vadd.f32 %v1815, %v1816
        %v1818 = vrot.slane %v1817, 1
        %v1819 = vadd.f32 %v1817, %v1818
        %v1820 = vsel %vm582, %v1809, 0.0
        %v1821 = vsel %vm582, %v1810, 0.0
        %v1822 = vadd.f32 %v1820, %v1821
        %v1823 = vrot.slane %v1822, 4
        %v1824 = vadd.f32 %v1822, %v1823
        %v1825 = vrot.slane %v1824, 2
        %v1826 = vadd.f32 %v1824, %v1825
        %v1827 = vrot.slane %v1826, 1
        %v1828 = vadd.f32 %v1826, %v1827
        %v1831 = vsel %vm1524, %v1828, %v1819
        %s1833 = scalar_lea.vmem [#allocation5], 12
        %1834 = vst.msk [vmem:[%s1833] sm:$0x3] %vm1527, %v1831
        %s1835 = scalar_lea.vmem [#allocation2], 224
        %v1836 = vld [vmem:[%s1835] sm:$0xff]
        %v1837 = vld [vmem:[%s1835 + $0x8] sm:$0xff]
        %v1838 = vld [vmem:[%s1835 + $0x10] sm:$0xff]
        %v1839 = vld [vmem:[%s1835 + $0x18] sm:$0xff]
        %v1840 = vmul.f32 %v1836, %v1798
        %v1841 = vmul.f32 %v1837, %v1799
        %v1842 = vmul.f32 %v1838, %v1800
        %v1843 = vmul.f32 %v1839, %v1801
        %s1844 = scalar_lea.vmem [#allocation3], 224
        %v1845 = vld [vmem:[%s1844] sm:$0xff]
        %v1846 = vld [vmem:[%s1844 + $0x8] sm:$0xff]
        %v1847 = vld [vmem:[%s1844 + $0x10] sm:$0xff]
        %v1848 = vld [vmem:[%s1844 + $0x18] sm:$0xff]
        %v1849 = vadd.f32 %v1840, %v1845
        %v1850 = vadd.f32 %v1841, %v1846
        %v1851 = vadd.f32 %v1842, %v1847
        %v1852 = vadd.f32 %v1843, %v1848
        %s1853 = scalar_lea.vmem [#allocation4], 224
        %v1854 = vld [vmem:[%s1853] sm:$0xff]
        %v1855 = vld [vmem:[%s1853 + $0x8] sm:$0xff]
        %v1856 = vld [vmem:[%s1853 + $0x10] sm:$0xff]
        %v1857 = vld [vmem:[%s1853 + $0x18] sm:$0xff]
        %v1858 = vmul.f32 %v1854, %v1849
        %v1859 = vmul.f32 %v1855, %v1850
        %v1860 = vmul.f32 %v1856, %v1851
        %v1861 = vmul.f32 %v1857, %v1852
        %v1862 = vsel %vm582, %v1858, 0.0
        %v1863 = vsel %vm582, %v1859, 0.0
        %v1864 = vadd.f32 %v1862, %v1863
        %v1865 = vrot.slane %v1864, 4
        %v1866 = vadd.f32 %v1864, %v1865
        %v1867 = vrot.slane %v1866, 2
        %v1868 = vadd.f32 %v1866, %v1867
        %v1869 = vrot.slane %v1868, 1
        %v1870 = vadd.f32 %v1868, %v1869
        %v1871 = vsel %vm582, %v1860, 0.0
        %v1872 = vsel %vm582, %v1861, 0.0
        %v1873 = vadd.f32 %v1871, %v1872
        %v1874 = vrot.slane %v1873, 4
        %v1875 = vadd.f32 %v1873, %v1874
        %v1876 = vrot.slane %v1875, 2
        %v1877 = vadd.f32 %v1875, %v1876
        %v1878 = vrot.slane %v1877, 1
        %v1879 = vadd.f32 %v1877, %v1878
        %v1882 = vsel %vm1524, %v1879, %v1870
        %s1884 = scalar_lea.vmem [#allocation5], 14
        %1885 = vst.msk [vmem:[%s1884] sm:$0x3] %vm1527, %v1882
        %v1886 = vld [vmem:[#allocation5] sm:$0x1]
        %v1887 = vld [vmem:[#allocation5 + $0x2] sm:$0x1]
        %v1888 = vld [vmem:[#allocation5 + $0x4] sm:$0x1]
        %v1889 = vld [vmem:[#allocation5 + $0x6] sm:$0x1]
        %v1890 = vld [vmem:[#allocation5 + $0x8] sm:$0x1]
        %v1891 = vld [vmem:[#allocation5 + $0xa] sm:$0x1]
        %v1892 = vld [vmem:[#allocation5 + $0xc] sm:$0x1]
        %v1893 = vld [vmem:[#allocation5 + $0xe] sm:$0x1]
        %v1894 = vld [vmem:[#allocation5 + $0x1] sm:$0x1]
        %v1895 = vld [vmem:[#allocation5 + $0x3] sm:$0x1]
        %v1896 = vld [vmem:[#allocation5 + $0x5] sm:$0x1]
        %v1897 = vld [vmem:[#allocation5 + $0x7] sm:$0x1]
        %v1898 = vld [vmem:[#allocation5 + $0x9] sm:$0x1]
        %v1899 = vld [vmem:[#allocation5 + $0xb] sm:$0x1]
        %v1900 = vld [vmem:[#allocation5 + $0xd] sm:$0x1]
        %v1901 = vld [vmem:[#allocation5 + $0xf] sm:$0x1]
        %v1910 = vrot.slane %v1887, 7
        %v1911 = vsel %vm1524, %v1910, %v1886
        %v1912 = vrot.slane %v1888, 6
        %vm1913 = vcmask 1042434
        %v1914 = vsel %vm1913, %v1912, %v1911
        %v1915 = vrot.slane %v1889, 5
        %vm1916 = vcmask 1043459
        %v1917 = vsel %vm1916, %v1915, %v1914
        %v1918 = vrot.slane %v1890, 4
        %vm1919 = vcmask 1044484
        %v1920 = vsel %vm1919, %v1918, %v1917
        %v1921 = vrot.slane %v1891, 3
        %vm1922 = vcmask 1045509
        %v1923 = vsel %vm1922, %v1921, %v1920
        %v1924 = vrot.slane %v1892, 2
        %vm1925 = vcmask 1046534
        %v1926 = vsel %vm1925, %v1924, %v1923
        %v1927 = vrot.slane %v1893, 1
        %vm1928 = vcmask 1047559
        %v1929 = vsel %vm1928, %v1927, %v1926
        %v1939 = vrot.slane %v1895, 7
        %v1940 = vsel %vm1524, %v1939, %v1894
        %v1941 = vrot.slane %v1896, 6
        %v1942 = vsel %vm1913, %v1941, %v1940
        %v1943 = vrot.slane %v1897, 5
        %v1944 = vsel %vm1916, %v1943, %v1942
        %v1945 = vrot.slane %v1898, 4
        %v1946 = vsel %vm1919, %v1945, %v1944
        %v1947 = vrot.slane %v1899, 3
        %v1948 = vsel %vm1922, %v1947, %v1946
        %v1949 = vrot.slane %v1900, 2
        %v1950 = vsel %vm1925, %v1949, %v1948
        %v1951 = vrot.slane %v1901, 1
        %v1952 = vsel %vm1928, %v1951, %v1950
        %v1955 = vlaneseq
        %v1956 = vshrl.u32 %v1955, 7
        %v1957 = vsub.s32 0, %v1956
        %v1958 = vrot.slane %v396, %v1957
        %v1960 = vmul.f32 %v555, %v1958
        %v1961 = vmul.f32 %v556, %v1958
        %v1962 = vadd.f32 %v1929, %v1960
        %v1963 = vadd.f32 %v1952, %v1961
        %v1964 = vmul.f32 %v451, 0.5
        %v1965 = vmul.f32 %v454, 0.5
        %v1966 = vtanh.pop %v1964
        %v1967 = vtanh.pop %v1965
        %v1968 = vadd.f32 %v1966, 1.0
        %v1969 = vadd.f32 %v1967, 1.0
        %v1970 = vmul.f32 %v1964, %v1968
        %v1971 = vmul.f32 %v1965, %v1969
        %1974 = vrot.lane.b32.xlu0 %v1970, 64
        %v1975 = vpop.permute.xlu0 %1974
        %1976 = vrot.lane.b32.xlu0 %v1971, 64
        %v1977 = vpop.permute.xlu0 %1976
        %v1980 = vmul.f32 %v1962, %v1975
        %v1981 = vmul.f32 %v1963, %v1977
        %v1982 = vpack.c.bf16 %v1981, %v1980
        %v1991 = vunpack.c.l.b16 %v377
        %v1992 = vunpack.c.l.b16 %v378
        %v1993 = vunpack.c.l.b16 %v379
        %v1994 = vunpack.c.l.b16 %v380
        %v1995 = vunpack.c.l.b16 %v381
        %v1996 = vunpack.c.l.b16 %v382
        %v1997 = vunpack.c.l.b16 %v383
        %v1998 = vunpack.c.l.b16 %v384
        %v1999 = vpack.c.b16 %v1992, %v1991
        %v2000 = vpack.c.b16 %v1994, %v1993
        %v2001 = vpack.c.b16 %v1996, %v1995
        %v2002 = vpack.c.b16 %v1998, %v1997
        %v2008 = vsel %vm582, %v1982, 0
        %2010 = vmatprep.subr.bf16.mxu0 0
        %2011 = vmatpush1.bf16.msra.mxu0 %v1999
        %2012 = vmatprep.subr.bf16.mxu0 0
        %2013 = vmatpush1.bf16.msra.mxu0 %v2000
        %2014 = vmatprep.subr.bf16.mxu0 0
        %2015 = vmatpush1.bf16.msra.mxu0 %v2001
        %2016 = vmatprep.subr.bf16.mxu0 0
        %2017 = vmatpush1.bf16.msra.mxu0 %v2002
        %2018 = vmatprep.subr.bf16.mxu0 0
        %2019 = vmatpush1.bf16.msra.mxu0 0
        %2020 = vmatprep.subr.bf16.mxu0 0
        %2021 = vmatpush1.bf16.msra.mxu0 0
        %2022 = vmatprep.subr.bf16.mxu0 0
        %2023 = vmatpush1.bf16.msra.mxu0 0
        %2024 = vmatprep.subr.bf16.mxu0 0
        %2025 = vmatpush1.bf16.msra.mxu0 0
        %2026 = vmatprep.subr.bf16.mxu0 0
        %2027 = vmatpush1.bf16.msra.mxu0 0
        %2028 = vmatprep.subr.bf16.mxu0 0
        %2029 = vmatpush1.bf16.msra.mxu0 0
        %2030 = vmatprep.subr.bf16.mxu0 0
        %2031 = vmatpush1.bf16.msra.mxu0 0
        %2032 = vmatprep.subr.bf16.mxu0 0
        %2033 = vmatpush1.bf16.msra.mxu0 0
        %2034 = vmatprep.subr.bf16.mxu0 0
        %2035 = vmatpush1.bf16.msra.mxu0 0
        %2036 = vmatprep.subr.bf16.mxu0 0
        %2037 = vmatpush1.bf16.msra.mxu0 0
        %2038 = vmatprep.subr.bf16.mxu0 0
        %2039 = vmatpush1.bf16.msra.mxu0 0
        %2040 = vmatprep.subr.bf16.mxu0 0
        %2041 = vmatpush1.bf16.msra.mxu0 0
        %2042 = vmatprep.mubr.bf16.mxu0 0
        %2043 = vmatmul.mubr.bf16.gmra.mrb[0].mxu0 %v2008
        %v2044 = vpop.f32.mrb[0].mxu0
        %v2045 = vadd.f32 0.0, %v2044
        %v2046 = vpop.f32.mrb[0].mxu0
        %v2047 = vpop.f32.mrb[0].mxu0
        %v2048 = vadd.f32 0.0, %v2047
        %v2049 = vpop.f32.mrb[0].mxu0
        %2050 = vdwg.mxu0
        %2051 = vst.msk [vmem:[%s356] sm:$0xff] %vm412, %v2045
        %2052 = vst.msk [vmem:[%s356 + $0x8] sm:$0xff] %vm412, %v2048
        %s2053 = sand.u32 %s227, 1
        %s2054 = scalar_lea.sflag [#allocation8], %s2053
        %s2055 = sand.u32 %s227, 1
        %s2056 = smul.addr %s2055, 16
        %s2057 = scalar_lea.vmem [#allocation11], %s2056
        // Predicated region
        $region65: #{tpu_custom_call.1} parent=55 // pred_check
          %p2058 = pneg %p237
        $region66: #{tpu_custom_call.1} parent=55 // pred_check_branch
          %2060 = sbr.rel (%p2058) target = $region68
        $region67: #{tpu_custom_call.1} parent=55 // pred_region
          %s2061 = smul.u32 2, %s25
          %s2063 = ssub.s32 256, 256
          %2064 = vsyncadd %s2054, %s2063
          %s2065 = smul.addr %s2061, 128
          %s2066 = scalar_lea.hbm %s9, %s2065
          %s2067 = sshll.u32 %s2057, 4
          %s2068 = int_to_ptr.vmem [resolvable:$true] %s2067
          %2073 = dma.vmem_to_hbm [thread:$0]  %s2068, 256, %s2066, %s2054, 128, 128, 8
        $region68: #{tpu_custom_call.1} parent=55 // pred_fallthru
          _
      $region56: #{tpu_custom_call.1} parent=5 // pred_fallthru
        _
      %p2074 = scmp.le.s32.totalorder 2, %s20
      // Predicated region
      $region69: #{tpu_custom_call.1} parent=5 // pred_check
        %p2075 = pneg %p2074
      $region70: #{tpu_custom_call.1} parent=5 // pred_check_branch
        %2077 = sbr.rel (%p2075) target = $region72
      $region71: #{tpu_custom_call.1} parent=5 // pred_region
        %s2078 = ssub.s32 %s20, 2
        // Predicated region
        $region73: #{tpu_custom_call.1} parent=71 // pred_check
          %p2079 = pneg %p243
        $region74: #{tpu_custom_call.1} parent=71 // pred_check_branch
          %2081 = sbr.rel (%p2079) target = $region76
        $region75: #{tpu_custom_call.1} parent=71 // pred_region
          %s2082 = sand.u32 %s228, 1
          %s2083 = scalar_lea.sflag [#allocation8], %s2082
          %s2084 = sand.u32 %s228, 1
          %s2085 = smul.addr %s2084, 16
          %s2086 = scalar_lea.vmem [#allocation11], %s2085
          %2087 = dma.done %s2083, 256
        $region76: #{tpu_custom_call.1} parent=71 // pred_fallthru
          _
      $region72: #{tpu_custom_call.1} parent=5 // pred_fallthru
        _
    $region6: #{tpu_custom_call.1} parent=1 // loop_footer
      %s24 = sadd.s32 1, %s20
    $region7: #{tpu_custom_call.1} parent=1 // loop_footer_branch
      %19 = sbr.rel target = $region3
    $region8: #{tpu_custom_call.1} parent=1 // loop_exit
      _
    %2088 = vsyncpa [#allocation7], 1
    %s2089 = scalar_lea.sflag [#allocation7], 1
    %2090 = vsyncpa %s2089, 1
    %2091 = vsyncpa [#allocation10], 1
    %2092 = vsyncpa [#allocation8], 1
    %s2093 = scalar_lea.sflag [#allocation8], 1
    %2094 = vsyncpa %s2093, 1

</llo_original>
